<compile_context>
chip_gen: v7x
topology: tpu7x:2x2x1
jax: 0.10.0
libtpu: 0.0.40
codegen_flags: <defaults>
</compile_context>

<pallas_src>
import jax
import jax.numpy as jnp
from jax import lax
from jax.experimental import pallas as pl
from jax.experimental.pallas import tpu as pltpu

H, W_BOARD = 6, 7            # Connect-Four board (6 rows x 7 cols)
C_IN = 2                     # two player planes
C_MID = 16
K1 = C_IN * H * W_BOARD      # 84  = NCHW-flattened input board
FLAT = C_MID * H * W_BOARD   # 672 = flattened conv activation (nn.Flatten order)
HIDDEN = 128
FLATP = 768                  # 672 -> 768 (lane aligned, 6 * 128)

_WEIGHT_KEYS = ('w1', 'b1', 'w2', 'b2', 'w3', 'b3', 'w4', 'b4')


def _round_up(n, m):
    return ((n + m - 1) // m) * m


def _cdiv(a, b):
    return -(-a // b)


def _pad2d(x, rows, cols):
    return jnp.pad(x, ((0, rows - x.shape[0]), (0, cols - x.shape[1])))


# ---------------- Pallas kernels: the whole forward, fused -------------------

def _head(x, w1, b1, w2, b2, w3, b3, w4, b4, out_dtype):
    """ReLU(ReLU(ReLU(x@W1+b1)@W2+b2)@W3+b3)@W4+b4 for one batch tile.

    All matmuls accumulate in f32 on the MXU; bias/ReLU epilogues run in f32.
    """
    h = jnp.dot(x, w1[...], preferred_element_type=jnp.float32)
    h = jnp.maximum(h + b1[...], 0.0)                                  # conv1 + ReLU
    h = jnp.dot(h.astype(w2.dtype), w2[...], preferred_element_type=jnp.float32)
    h = jnp.maximum(h + b2[...], 0.0)                                  # conv2 + ReLU
    h = jnp.dot(h.astype(w3.dtype), w3[...], preferred_element_type=jnp.float32)
    h = jnp.maximum(h + b3[...], 0.0)                                  # fc1 + ReLU
    out = jnp.dot(h.astype(w4.dtype), w4[...], preferred_element_type=jnp.float32)
    return (out + b4[...]).astype(out_dtype)                           # fc2


def _single_kernel(x_ref, w1, b1, w2, b2, w3, b3, w4, b4, o_ref):
    o_ref[...] = _head(x_ref[...], w1, b1, w2, b2, w3, b3, w4, b4, o_ref.dtype)


def _both_kernel(x_ref, *refs):
    pw, tw = refs[0:8], refs[8:16]
    op_ref, ot_ref = refs[16], refs[17]
    x = x_ref[...]                       # single shared activation load/DMA
    op_ref[...] = _head(x, *pw, op_ref.dtype)
    ot_ref[...] = _head(x, *tw, ot_ref.dtype)


# ---------------- Wrappers -----------------------------------------------------

def _choose_tile(b, max_tile):
    """Balanced batch tiles (multiples of 8), and >= 2 grid steps whenever the
    batch allows so 'parallel' semantics can shard across v7x's two TCs."""
    bp8 = _round_up(b, 8)
    n_tiles = max(_cdiv(bp8, max_tile), 2 if bp8 >= 16 else 1)
    tile_b = _round_up(_cdiv(bp8, n_tiles), 8)
    return tile_b, n_tiles


def _weight_specs(p):
    # Grid-invariant blocks: full-array shape, constant index map, single
    # buffered (default double-buffering of never-changing weights wastes VMEM).
    return [pl.BlockSpec(p[k].shape, lambda i: (0, 0),
                         pipeline_mode=pl.Buffered(1)) for k in _WEIGHT_KEYS]


def _weight_args(p):
    return [p[k] for k in _WEIGHT_KEYS]


def _weight_bytes(p):
    return sum(p[k].size * p[k].dtype.itemsize for k in _WEIGHT_KEYS)


def _flops_per_row(outp):
    return 2 * (K1 * FLATP + FLATP * FLATP + FLATP * HIDDEN + HIDDEN * outp)


def _vmem_limit(tile_b, outp, weight_bytes, x_itemsize):
    live_acts = 6 * tile_b * FLATP * 4                         # live f32 intermediates
    io = 2 * tile_b * K1 * x_itemsize + 4 * tile_b * outp * 4  # in/out double buffers
    est = weight_bytes + live_acts + io + (8 << 20)            # + headroom
    return int(min(max(est, 24 << 20), 56 << 20))


def _prep_x(x, b, tile_b, n_tiles, dtype):
    # NCHW flatten is a pure reshape (no transpose). Only the batch dim is
    # padded; K stays at 84 (Mosaic pads lanes internally at no MXU cost).
    bp = tile_b * n_tiles
    x_flat = x.reshape(b, K1).astype(dtype)
    return _pad2d(x_flat, bp, K1), bp


def forward_pallas(prepared, x, model, *, max_tile_b=512):
    """Equivalent of ConnectFourNet.forward(x, model), model in {'policy','target'}.

    `prepared` comes from prepare_params(); `x` is NCHW (B, 2, 6, 7) like PyTorch.
    """
    p = prepared[model]
    out_features, outp = p['out_features'], p['w4'].shape[1]
    b = x.shape[0]
    tile_b, n_tiles = _choose_tile(b, max_tile_b)
    x_pad, bp = _prep_x(x, b, tile_b, n_tiles, p['w1'].dtype)

    wbytes = _weight_bytes(p)
    cost = pl.CostEstimate(
        flops=bp * _flops_per_row(outp), transcendentals=0,
        bytes_accessed=x_pad.size * x_pad.dtype.itemsize + bp * outp * 4 + wbytes)

    out = pl.pallas_call(
        _single_kernel,
        out_shape=jax.ShapeDtypeStruct((bp, outp), jnp.float32),
        grid=(n_tiles,),
        in_specs=[pl.BlockSpec((tile_b, K1), lambda i: (i, 0))] + _weight_specs(p),
        out_specs=pl.BlockSpec((tile_b, outp), lambda i: (i, 0)),
        compiler_params=pltpu.CompilerParams(
            dimension_semantics=("parallel",),
            vmem_limit_bytes=_vmem_limit(tile_b, outp, wbytes, x_pad.dtype.itemsize)),
        cost_estimate=cost,
    )(x_pad, *_weight_args(p))
    return out[:b, :out_features]


def forward_pallas_both(prepared, x, *, max_tile_b=512):
    """Policy AND target heads on the same batch in ONE pallas_call (shared x
    DMA, one pipeline prologue/epilogue). Returns (policy_out, target_out)."""
    pp, pt = prepared['policy'], prepared['target']
    out_features, outp = pp['out_features'], pp['w4'].shape[1]
    b = x.shape[0]
    tile_b, n_tiles = _choose_tile(b, max_tile_b)
    x_pad, bp = _prep_x(x, b, tile_b, n_tiles, pp['w1'].dtype)

    wbytes = _weight_bytes(pp) + _weight_bytes(pt)
    cost = pl.CostEstimate(
        flops=2 * bp * _flops_per_row(outp), transcendentals=0,
        bytes_accessed=x_pad.size * x_pad.dtype.itemsize + 2 * bp * outp * 4 + wbytes)

    out_spec = pl.BlockSpec((tile_b, outp), lambda i: (i, 0))
    out_shape = jax.ShapeDtypeStruct((bp, outp), jnp.float32)
    o_policy, o_target = pl.pallas_call(
        _both_kernel,
        out_shape=(out_shape, out_shape),
        grid=(n_tiles,),
        in_specs=[pl.BlockSpec((tile_b, K1), lambda i: (i, 0))]
                 + _weight_specs(pp) + _weight_specs(pt),
        out_specs=(out_spec, out_spec),
        compiler_params=pltpu.CompilerParams(
            dimension_semantics=("parallel",),
            vmem_limit_bytes=_vmem_limit(tile_b, outp, wbytes, x_pad.dtype.itemsize)),
        cost_estimate=cost,
    )(x_pad, *_weight_args(pp), *_weight_args(pt))
    return o_policy[:b, :out_features], o_target[:b, :out_features]


# ---------------- One-time parameter preparation (outside the hot path) -----

def _conv3x3_as_dense(w):
    """Dense (Cin*H*W, Cout*H*W) matrix of a 3x3 / stride-1 / pad-1 conv acting
    on NCHW-flattened 6x7 boards (built by pushing the identity through the conv)."""
    cin = w.shape[1]
    n_in = cin * H * W_BOARD
    eye = jnp.eye(n_in, dtype=jnp.float32).reshape(n_in, cin, H, W_BOARD)
    cols = lax.conv_general_dilated(eye, w.astype(jnp.float32), (1, 1), ((1, 1), (1, 1)),
                                    dimension_numbers=('NCHW', 'OIHW', 'NCHW'))
    return cols.reshape(n_in, w.shape[0] * H * W_BOARD)


def prepare_params(params, dtype=jnp.bfloat16):
    """Expand convs to dense matrices, transpose fc weights, zero-pad everything
    once to lane-aligned shapes, and cast weights/activation dtype to `dtype`
    (bf16 default: MXU-native inputs, f32 accumulation). Biases stay f32: the
    bias/ReLU epilogue runs on the f32 MXU accumulator."""
    prepared = {}
    for name, p in params.items():
        out_features = p['fc2_w'].shape[0]
        outp = _round_up(out_features, 128)
        prepared[name] = {
            'w1': _pad2d(_conv3x3_as_dense(p['conv1_w']), K1, FLATP).astype(dtype),
            'b1': _pad2d(jnp.repeat(p['conv1_b'], H * W_BOARD)[None, :], 1, FLATP).astype(jnp.float32),
            'w2': _pad2d(_conv3x3_as_dense(p['conv2_w']), FLATP, FLATP).astype(dtype),
            'b2': _pad2d(jnp.repeat(p['conv2_b'], H * W_BOARD)[None, :], 1, FLATP).astype(jnp.float32),
            'w3': _pad2d(p['fc1_w'].T, FLATP, HIDDEN).astype(dtype),
            'b3': _pad2d(p['fc1_b'][None, :], 1, HIDDEN).astype(jnp.float32),
            'w4': _pad2d(p['fc2_w'].T, HIDDEN, outp).astype(dtype),
            'b4': _pad2d(p['fc2_b'][None, :], 1, outp).astype(jnp.float32),
            'out_features': out_features,   # static python int
        }
    return prepared


# ---------------- Parameter init (matches the PyTorch module) ---------------

def _xavier_uniform(key, shape, fan_in, fan_out):
    a = (6.0 / (fan_in + fan_out)) ** 0.5
    return jax.random.uniform(key, shape, jnp.float32, -a, a)


def _torch_default_bias(key, n, fan_in):
    # The original code calls `module.bias.data.zero_` without parens, so biases
    # keep PyTorch's default uniform(-1/sqrt(fan_in), 1/sqrt(fan_in)) init.
    bound = 1.0 / (fan_in ** 0.5)
    return jax.random.uniform(key, (n,), jnp.float32, -bound, bound)


def init_params(key, out_features):
    ks = jax.random.split(key, 8)
    policy = {
        'conv1_w': _xavier_uniform(ks[0], (C_MID, C_IN, 3, 3), C_IN * 9, C_MID * 9),
        'conv1_b': _torch_default_bias(ks[1], C_MID, C_IN * 9),
        'conv2_w': _xavier_uniform(ks[2], (C_MID, C_MID, 3, 3), C_MID * 9, C_MID * 9),
        'conv2_b': _torch_default_bias(ks[3], C_MID, C_MID * 9),
        'fc1_w': _xavier_uniform(ks[4], (HIDDEN, FLAT), FLAT, HIDDEN),
        'fc1_b': _torch_default_bias(ks[5], HIDDEN, FLAT),
        'fc2_w': _xavier_uniform(ks[6], (out_features, HIDDEN), HIDDEN, out_features),
        'fc2_b': _torch_default_bias(ks[7], out_features, HIDDEN),
    }
    # self.target = copy.deepcopy(self.policy): identical values at init time.
    target = jax.tree_util.tree_map(lambda t: t.copy(), policy)
    return {'policy': policy, 'target': target}


# ---------------- Pure-JAX reference (verification only) --------------------

def forward_reference(params, x, model):
    p = params[model]

    def conv(inp, w, b):
        y = lax.conv_general_dilated(inp, w, (1, 1), ((1, 1), (1, 1)),
                                     dimension_numbers=('NCHW', 'OIHW', 'NCHW'))
        return y + b[None, :, None, None]

    h = jax.nn.relu(conv(x, p['conv1_w'], p['conv1_b']))
    h = jax.nn.relu(conv(h, p['conv2_w'], p['conv2_b']))
    flat = h.reshape(x.shape[0], -1)
    h = jax.nn.relu(flat @ p['fc1_w'].T + p['fc1_b'])
    return h @ p['fc2_w'].T + p['fc2_b']


# TODO(synk): layer_summary() is a host-side printing utility with no kernel equivalent.

if __name__ == "__main__":
    key = jax.random.PRNGKey(0)
    pkey, xkey = jax.random.split(key)
    out_features = 7  # one logit per Connect-Four column
    params = init_params(pkey, out_features)
    x = jax.random.normal(xkey, (2, C_IN, H, W_BOARD), jnp.float32)

    ref_policy = forward_reference(params, x, 'policy')
    ref_target = forward_reference(params, x, 'target')

    # f32 path: tight numerical validation of the conv-as-dense formulation.
    prepared_f32 = prepare_params(params, dtype=jnp.float32)
    out_p32 = jax.block_until_ready(forward_pallas(prepared_f32, x, 'policy'))
    out_t32 = jax.block_until_ready(forward_pallas(prepared_f32, x, 'target'))
    assert out_p32.shape == (2, out_features)
    assert out_t32.shape == (2, out_features)
    assert jnp.allclose(out_p32, ref_policy, rtol=1e-4, atol=1e-4)
    assert jnp.allclose(out_t32, ref_target, rtol=1e-4, atol=1e-4)

    # Default bf16 hot path, policy + target fused into one pallas_call.
    prepared = prepare_params(params)   # bf16 weights / activations
    out_policy, out_target = forward_pallas_both(prepared, x)
    out_policy, out_target = jax.block_until_ready((out_policy, out_target))
    assert out_policy.shape == (2, out_features)
    assert out_target.shape == (2, out_features)
    assert jnp.allclose(out_policy, ref_policy, rtol=5e-2, atol=5e-2)
    assert jnp.allclose(out_target, ref_target, rtol=5e-2, atol=5e-2)
    print("KERNEL_OK")
</pallas_src>

<mosaic_0001>
module attributes {stable_mosaic.version = 11 : i64} {
  func.func @_single_kernel(%arg0: i32, %arg1: memref<8x84xf32, #tpu.memory_space<vmem>>, %arg2: memref<84x768xf32, #tpu.memory_space<vmem>>, %arg3: memref<1x768xf32, #tpu.memory_space<vmem>>, %arg4: memref<768x768xf32, #tpu.memory_space<vmem>>, %arg5: memref<1x768xf32, #tpu.memory_space<vmem>>, %arg6: memref<768x128xf32, #tpu.memory_space<vmem>>, %arg7: memref<1x128xf32, #tpu.memory_space<vmem>>, %arg8: memref<128x128xf32, #tpu.memory_space<vmem>>, %arg9: memref<1x128xf32, #tpu.memory_space<vmem>>, %arg10: memref<8x128xf32, #tpu.memory_space<vmem>>) attributes {dimension_semantics = [#tpu.dimension_semantics<parallel>], iteration_bounds = array<i64: 1>, scalar_prefetch = 0 : i64, scratch_operands = 0 : i64, tpu.core_type = #tpu.core_type<tc>, window_params = [{transform_indices = @transform_0, window_bounds = array<i64: 8, 84>}, {pipeline_mode = #tpu.pipeline_mode<synchronous>, transform_indices = @transform_1, window_bounds = array<i64: 84, 768>}, {pipeline_mode = #tpu.pipeline_mode<synchronous>, transform_indices = @transform_2, window_bounds = array<i64: 1, 768>}, {pipeline_mode = #tpu.pipeline_mode<synchronous>, transform_indices = @transform_3, window_bounds = array<i64: 768, 768>}, {pipeline_mode = #tpu.pipeline_mode<synchronous>, transform_indices = @transform_4, window_bounds = array<i64: 1, 768>}, {pipeline_mode = #tpu.pipeline_mode<synchronous>, transform_indices = @transform_5, window_bounds = array<i64: 768, 128>}, {pipeline_mode = #tpu.pipeline_mode<synchronous>, transform_indices = @transform_6, window_bounds = array<i64: 1, 128>}, {pipeline_mode = #tpu.pipeline_mode<synchronous>, transform_indices = @transform_7, window_bounds = array<i64: 128, 128>}, {pipeline_mode = #tpu.pipeline_mode<synchronous>, transform_indices = @transform_8, window_bounds = array<i64: 1, 128>}, {transform_indices = @transform_9, window_bounds = array<i64: 8, 128>}]} {
    %c0 = arith.constant 0 : index
    %c0_0 = arith.constant 0 : index
    %0 = vector.load %arg1[%c0, %c0_0] : memref<8x84xf32, #tpu.memory_space<vmem>>, vector<8x84xf32>
    %c0_1 = arith.constant 0 : index
    %c0_2 = arith.constant 0 : index
    %1 = vector.load %arg2[%c0_1, %c0_2] : memref<84x768xf32, #tpu.memory_space<vmem>>, vector<84x768xf32>
    %cst = arith.constant dense<0.000000e+00> : vector<8x768xf32>
    %2 = tpu.matmul %0, %1, %cst {dimension_numbers = #tpu.dot_dimension_numbers<[1], [0], [0], [1], [0, 0, 1, 1], [], []>} : vector<8x84xf32>, vector<84x768xf32>, vector<8x768xf32> -> vector<8x768xf32>
    %c0_3 = arith.constant 0 : index
    %c0_4 = arith.constant 0 : index
    %3 = vector.load %arg3[%c0_3, %c0_4] : memref<1x768xf32, #tpu.memory_space<vmem>>, vector<1x768xf32>
    %4 = vector.broadcast %3 : vector<1x768xf32> to vector<8x768xf32>
    %5 = arith.addf %2, %4 : vector<8x768xf32>
    %cst_5 = arith.constant 0.000000e+00 : f32
    %6 = vector.broadcast %cst_5 : f32 to vector<8x768xf32>
    %7 = arith.maximumf %5, %6 : vector<8x768xf32>
    %c0_6 = arith.constant 0 : index
    %c0_7 = arith.constant 0 : index
    %8 = vector.load %arg4[%c0_6, %c0_7] : memref<768x768xf32, #tpu.memory_space<vmem>>, vector<768x768xf32>
    %cst_8 = arith.constant dense<0.000000e+00> : vector<8x768xf32>
    %9 = tpu.matmul %7, %8, %cst_8 {dimension_numbers = #tpu.dot_dimension_numbers<[1], [0], [0], [1], [0, 0, 1, 1], [], []>} : vector<8x768xf32>, vector<768x768xf32>, vector<8x768xf32> -> vector<8x768xf32>
    %c0_9 = arith.constant 0 : index
    %c0_10 = arith.constant 0 : index
    %10 = vector.load %arg5[%c0_9, %c0_10] : memref<1x768xf32, #tpu.memory_space<vmem>>, vector<1x768xf32>
    %11 = vector.broadcast %10 : vector<1x768xf32> to vector<8x768xf32>
    %12 = arith.addf %9, %11 : vector<8x768xf32>
    %cst_11 = arith.constant 0.000000e+00 : f32
    %13 = vector.broadcast %cst_11 : f32 to vector<8x768xf32>
    %14 = arith.maximumf %12, %13 : vector<8x768xf32>
    %c0_12 = arith.constant 0 : index
    %c0_13 = arith.constant 0 : index
    %15 = vector.load %arg6[%c0_12, %c0_13] : memref<768x128xf32, #tpu.memory_space<vmem>>, vector<768x128xf32>
    %cst_14 = arith.constant dense<0.000000e+00> : vector<8x128xf32>
    %16 = tpu.matmul %14, %15, %cst_14 {dimension_numbers = #tpu.dot_dimension_numbers<[1], [0], [0], [1], [0, 0, 1, 1], [], []>} : vector<8x768xf32>, vector<768x128xf32>, vector<8x128xf32> -> vector<8x128xf32>
    %c0_15 = arith.constant 0 : index
    %c0_16 = arith.constant 0 : index
    %17 = vector.load %arg7[%c0_15, %c0_16] : memref<1x128xf32, #tpu.memory_space<vmem>>, vector<1x128xf32>
    %18 = vector.broadcast %17 : vector<1x128xf32> to vector<8x128xf32>
    %19 = arith.addf %16, %18 : vector<8x128xf32>
    %cst_17 = arith.constant 0.000000e+00 : f32
    %20 = vector.broadcast %cst_17 : f32 to vector<8x128xf32>
    %21 = arith.maximumf %19, %20 : vector<8x128xf32>
    %c0_18 = arith.constant 0 : index
    %c0_19 = arith.constant 0 : index
    %22 = vector.load %arg8[%c0_18, %c0_19] : memref<128x128xf32, #tpu.memory_space<vmem>>, vector<128x128xf32>
    %cst_20 = arith.constant dense<0.000000e+00> : vector<8x128xf32>
    %23 = tpu.matmul %21, %22, %cst_20 {dimension_numbers = #tpu.dot_dimension_numbers<[1], [0], [0], [1], [0, 0, 1, 1], [], []>} : vector<8x128xf32>, vector<128x128xf32>, vector<8x128xf32> -> vector<8x128xf32>
    %c0_21 = arith.constant 0 : index
    %c0_22 = arith.constant 0 : index
    %24 = vector.load %arg9[%c0_21, %c0_22] : memref<1x128xf32, #tpu.memory_space<vmem>>, vector<1x128xf32>
    %25 = vector.broadcast %24 : vector<1x128xf32> to vector<8x128xf32>
    %26 = arith.addf %23, %25 : vector<8x128xf32>
    %c0_23 = arith.constant 0 : index
    %c0_24 = arith.constant 0 : index
    %27 = vector.load %arg10[%c0_23, %c0_24] : memref<8x128xf32, #tpu.memory_space<vmem>>, vector<8x128xf32>
    tpu.vector_store %arg10[%c0_23, %c0_24], %26 {strides = array<i32>} : memref<8x128xf32, #tpu.memory_space<vmem>>, vector<8x128xf32>,
    return
  }
  func.func @transform_0(%arg0: i32) -> (i32, i32) {
    %c0_i32 = arith.constant 0 : i32
    %c0_i32_0 = arith.constant 0 : i32
    return %arg0, %c0_i32 : i32, i32
  }
  func.func @transform_1(%arg0: i32) -> (i32, i32) {
    %c0_i32 = arith.constant 0 : i32
    %c0_i32_0 = arith.constant 0 : i32
    %c0_i32_1 = arith.constant 0 : i32
    return %c0_i32, %c0_i32_0 : i32, i32
  }
  func.func @transform_2(%arg0: i32) -> (i32, i32) {
    %c0_i32 = arith.constant 0 : i32
    %c0_i32_0 = arith.constant 0 : i32
    %c0_i32_1 = arith.constant 0 : i32
    return %c0_i32, %c0_i32_0 : i32, i32
  }
  func.func @transform_3(%arg0: i32) -> (i32, i32) {
    %c0_i32 = arith.constant 0 : i32
    %c0_i32_0 = arith.constant 0 : i32
    %c0_i32_1 = arith.constant 0 : i32
    return %c0_i32, %c0_i32_0 : i32, i32
  }
  func.func @transform_4(%arg0: i32) -> (i32, i32) {
    %c0_i32 = arith.constant 0 : i32
    %c0_i32_0 = arith.constant 0 : i32
    %c0_i32_1 = arith.constant 0 : i32
    return %c0_i32, %c0_i32_0 : i32, i32
  }
  func.func @transform_5(%arg0: i32) -> (i32, i32) {
    %c0_i32 = arith.constant 0 : i32
    %c0_i32_0 = arith.constant 0 : i32
    %c0_i32_1 = arith.constant 0 : i32
    return %c0_i32, %c0_i32_0 : i32, i32
  }
  func.func @transform_6(%arg0: i32) -> (i32, i32) {
    %c0_i32 = arith.constant 0 : i32
    %c0_i32_0 = arith.constant 0 : i32
    %c0_i32_1 = arith.constant 0 : i32
    return %c0_i32, %c0_i32_0 : i32, i32
  }
  func.func @transform_7(%arg0: i32) -> (i32, i32) {
    %c0_i32 = arith.constant 0 : i32
    %c0_i32_0 = arith.constant 0 : i32
    %c0_i32_1 = arith.constant 0 : i32
    return %c0_i32, %c0_i32_0 : i32, i32
  }
  func.func @transform_8(%arg0: i32) -> (i32, i32) {
    %c0_i32 = arith.constant 0 : i32
    %c0_i32_0 = arith.constant 0 : i32
    %c0_i32_1 = arith.constant 0 : i32
    return %c0_i32, %c0_i32_0 : i32, i32
  }
  func.func @transform_9(%arg0: i32) -> (i32, i32) {
    %c0_i32 = arith.constant 0 : i32
    %c0_i32_0 = arith.constant 0 : i32
    return %arg0, %c0_i32 : i32, i32
  }
}

</mosaic_0001>

<llo_original>
// kernel: tpu_custom_call.1
$region0: #{tpu_custom_call.1}
  #allocation0 [shape = 'u32[]', space=smem, size = 0x4, offset = 0x4, fixed_abs, tag = 'smem constant byte address 0x4 - core index']
  #allocation1 [shape = 'u32[144,128]{1,0:T(1,128)}', space=vmem, size = 0x12000, scoped, tag = 'internal scratch']
  %s0 = inlined_call_operand.hbm [shape: f32[8,84], index: 0, kind: input, shape index: {}]
  %s1 = inlined_call_operand.hbm [shape: f32[84,768], index: 1, kind: input, shape index: {}]
  %s2 = inlined_call_operand.hbm [shape: f32[1,768], index: 2, kind: input, shape index: {}]
  %s3 = inlined_call_operand.hbm [shape: f32[768,768], index: 3, kind: input, shape index: {}]
  %s4 = inlined_call_operand.hbm [shape: f32[1,768], index: 4, kind: input, shape index: {}]
  %s5 = inlined_call_operand.hbm [shape: f32[768,128], index: 5, kind: input, shape index: {}]
  %s6 = inlined_call_operand.hbm [shape: f32[1,128], index: 6, kind: input, shape index: {}]
  %s7 = inlined_call_operand.hbm [shape: f32[128,128], index: 7, kind: input, shape index: {}]
  %s8 = inlined_call_operand.hbm [shape: f32[1,128], index: 8, kind: input, shape index: {}]
  %s9 = inlined_call_operand.hbm [shape: f32[8,128], index: 9, kind: output, shape index: {}]
  %s10 = sld [smem:[#allocation0]]
  $region82: #{tpu_custom_call.1} parent=0
    _
  %s12 = ssub.s32 1, %s10
  %s13 = scalar_select 0, %s12, %s10
  $region1: #{tpu_custom_call.1} parent=0
    #allocation2 [shape = 'u8[4096]{0}', space=vmem, size = 0x1000, scoped, tag = 'input window, operand 0, single buffered']
    #allocation3 [shape = 's32[1]{0}', space=sflag, size = 0x4, scoped, tag = 'scoped memory for tpu_custom_call.1']
    #allocation4 [shape = 's32[1]{0}', space=sflag, size = 0x4, scoped, tag = 'scoped memory for tpu_custom_call.1']
    #allocation5 [shape = 'u8[270336]{0}', space=vmem, size = 0x42000, scoped, tag = 'input window, operand 1, single buffered']
    #allocation6 [shape = 's32[1]{0}', space=sflag, size = 0x4, scoped, tag = 'scoped memory for tpu_custom_call.1']
    #allocation7 [shape = 'u8[3072]{0}', space=vmem, size = 0xc00, scoped, tag = 'input window, operand 2, single buffered']
    #allocation8 [shape = 'u8[2359296]{0}', space=vmem, size = 0x240000, scoped, tag = 'input window, operand 3, single buffered']
    #allocation9 [shape = 's32[1]{0}', space=sflag, size = 0x4, scoped, tag = 'scoped memory for tpu_custom_call.1']
    #allocation10 [shape = 'u8[3072]{0}', space=vmem, size = 0xc00, scoped, tag = 'input window, operand 4, single buffered']
    #allocation11 [shape = 'u8[393216]{0}', space=vmem, size = 0x60000, scoped, tag = 'input window, operand 5, single buffered']
    #allocation12 [shape = 's32[1]{0}', space=sflag, size = 0x4, scoped, tag = 'scoped memory for tpu_custom_call.1']
    #allocation13 [shape = 'u8[512]{0}', space=vmem, size = 0x400, scoped, tag = 'input window, operand 6, single buffered']
    #allocation14 [shape = 'u8[65536]{0}', space=vmem, size = 0x10000, scoped, tag = 'input window, operand 7, single buffered']
    #allocation15 [shape = 's32[1]{0}', space=sflag, size = 0x4, scoped, tag = 'scoped memory for tpu_custom_call.1']
    #allocation16 [shape = 'u8[512]{0}', space=vmem, size = 0x400, scoped, tag = 'input window, operand 8, single buffered']
    #allocation17 [shape = 'u8[4096]{0}', space=vmem, size = 0x1000, scoped, tag = 'output window, operand 0, single buffered']
    %14 = vsyncpa [#allocation3], 0
    %15 = vsyncpa [#allocation6], 0
    %16 = vsyncpa [#allocation9], 0
    %17 = vsyncpa [#allocation12], 0
    %18 = vsyncpa [#allocation15], 0
    %19 = vsyncpa [#allocation4], 0
    // Predicated region
    $region2: #{tpu_custom_call.1} parent=1 // pred_check
      _
    $region3: #{tpu_custom_call.1} parent=1 // pred_check_branch
      %21 = sbr.rel (0) target = $region5
    $region4: #{tpu_custom_call.1} parent=1 // pred_region
      %s23 = ssub.s32 128, 128
      %24 = vsyncadd [#allocation3], %s23
      %s26 = sshll.u32 [#allocation2], 4
      %s27 = int_to_ptr.vmem [resolvable:$true] %s26
      %29 = dma.hbm_to_vmem [thread:$0]  %s0, 128, %s27, [#allocation3]
    $region5: #{tpu_custom_call.1} parent=1 // pred_fallthru
      _
    // Predicated region
    $region6: #{tpu_custom_call.1} parent=1 // pred_check
      _
    $region7: #{tpu_custom_call.1} parent=1 // pred_check_branch
      %31 = sbr.rel (0) target = $region9
    $region8: #{tpu_custom_call.1} parent=1 // pred_region
      %s33 = ssub.s32 8448, 8448
      %34 = vsyncadd [#allocation6], %s33
      %s35 = sshll.u32 [#allocation5], 4
      %s36 = int_to_ptr.vmem [resolvable:$true] %s35
      %41 = dma.hbm_to_vmem [thread:$0]  %s1, 8448, %s36, [#allocation6], 768, 768, 48
    $region9: #{tpu_custom_call.1} parent=1 // pred_fallthru
      _
    // Predicated region
    $region10: #{tpu_custom_call.1} parent=1 // pred_check
      _
    $region11: #{tpu_custom_call.1} parent=1 // pred_check_branch
      %43 = sbr.rel (0) target = $region13
    $region12: #{tpu_custom_call.1} parent=1 // pred_region
      %s45 = ssub.s32 96, 96
      %46 = vsyncadd [#allocation6], %s45
      %s48 = sshll.u32 [#allocation7], 4
      %s49 = int_to_ptr.vmem [resolvable:$true] %s48
      %51 = dma.hbm_to_vmem [thread:$0]  %s2, 96, %s49, [#allocation6]
    $region13: #{tpu_custom_call.1} parent=1 // pred_fallthru
      _
    // Predicated region
    $region14: #{tpu_custom_call.1} parent=1 // pred_check
      _
    $region15: #{tpu_custom_call.1} parent=1 // pred_check_branch
      %53 = sbr.rel (0) target = $region17
    $region16: #{tpu_custom_call.1} parent=1 // pred_region
      %s55 = ssub.s32 73728, 73728
      %56 = vsyncadd [#allocation9], %s55
      %s57 = sshll.u32 [#allocation8], 4
      %s58 = int_to_ptr.vmem [resolvable:$true] %s57
      %63 = dma.hbm_to_vmem [thread:$0]  %s3, 73728, %s58, [#allocation9], 768, 768, 48
    $region17: #{tpu_custom_call.1} parent=1 // pred_fallthru
      _
    // Predicated region
    $region18: #{tpu_custom_call.1} parent=1 // pred_check
      _
    $region19: #{tpu_custom_call.1} parent=1 // pred_check_branch
      %65 = sbr.rel (0) target = $region21
    $region20: #{tpu_custom_call.1} parent=1 // pred_region
      %s67 = ssub.s32 96, 96
      %68 = vsyncadd [#allocation9], %s67
      %s70 = sshll.u32 [#allocation10], 4
      %s71 = int_to_ptr.vmem [resolvable:$true] %s70
      %73 = dma.hbm_to_vmem [thread:$0]  %s4, 96, %s71, [#allocation9]
    $region21: #{tpu_custom_call.1} parent=1 // pred_fallthru
      _
    // Predicated region
    $region22: #{tpu_custom_call.1} parent=1 // pred_check
      _
    $region23: #{tpu_custom_call.1} parent=1 // pred_check_branch
      %75 = sbr.rel (0) target = $region25
    $region24: #{tpu_custom_call.1} parent=1 // pred_region
      %s77 = ssub.s32 12288, 12288
      %78 = vsyncadd [#allocation12], %s77
      %s79 = sshll.u32 [#allocation11], 4
      %s80 = int_to_ptr.vmem [resolvable:$true] %s79
      %85 = dma.hbm_to_vmem [thread:$0]  %s5, 12288, %s80, [#allocation12], 128, 128, 8
    $region25: #{tpu_custom_call.1} parent=1 // pred_fallthru
      _
    // Predicated region
    $region26: #{tpu_custom_call.1} parent=1 // pred_check
      _
    $region27: #{tpu_custom_call.1} parent=1 // pred_check_branch
      %87 = sbr.rel (0) target = $region29
    $region28: #{tpu_custom_call.1} parent=1 // pred_region
      %s89 = ssub.s32 16, 16
      %90 = vsyncadd [#allocation12], %s89
      %s92 = sshll.u32 [#allocation13], 4
      %s93 = int_to_ptr.vmem [resolvable:$true] %s92
      %95 = dma.hbm_to_vmem [thread:$0]  %s6, 16, %s93, [#allocation12]
    $region29: #{tpu_custom_call.1} parent=1 // pred_fallthru
      _
    // Predicated region
    $region30: #{tpu_custom_call.1} parent=1 // pred_check
      _
    $region31: #{tpu_custom_call.1} parent=1 // pred_check_branch
      %97 = sbr.rel (0) target = $region33
    $region32: #{tpu_custom_call.1} parent=1 // pred_region
      %s99 = ssub.s32 2048, 2048
      %100 = vsyncadd [#allocation15], %s99
      %s101 = sshll.u32 [#allocation14], 4
      %s102 = int_to_ptr.vmem [resolvable:$true] %s101
      %107 = dma.hbm_to_vmem [thread:$0]  %s7, 2048, %s102, [#allocation15], 128, 128, 8
    $region33: #{tpu_custom_call.1} parent=1 // pred_fallthru
      _
    // Predicated region
    $region34: #{tpu_custom_call.1} parent=1 // pred_check
      _
    $region35: #{tpu_custom_call.1} parent=1 // pred_check_branch
      %109 = sbr.rel (0) target = $region37
    $region36: #{tpu_custom_call.1} parent=1 // pred_region
      %s111 = ssub.s32 16, 16
      %112 = vsyncadd [#allocation15], %s111
      %s114 = sshll.u32 [#allocation16], 4
      %s115 = int_to_ptr.vmem [resolvable:$true] %s114
      %117 = dma.hbm_to_vmem [thread:$0]  %s8, 16, %s115, [#allocation15]
    $region37: #{tpu_custom_call.1} parent=1 // pred_fallthru
      _
    // Predicated region
    $region38: #{tpu_custom_call.1} parent=1 // pred_check
      _
    $region39: #{tpu_custom_call.1} parent=1 // pred_check_branch
      %119 = sbr.rel (0) target = $region41
    $region40: #{tpu_custom_call.1} parent=1 // pred_region
      %120 = dma.done [#allocation3], 128
    $region41: #{tpu_custom_call.1} parent=1 // pred_fallthru
      _
    // Predicated region
    $region42: #{tpu_custom_call.1} parent=1 // pred_check
      _
    $region43: #{tpu_custom_call.1} parent=1 // pred_check_branch
      %122 = sbr.rel (0) target = $region45
    $region44: #{tpu_custom_call.1} parent=1 // pred_region
      %123 = dma.done [#allocation6], 8448
    $region45: #{tpu_custom_call.1} parent=1 // pred_fallthru
      _
    // Predicated region
    $region46: #{tpu_custom_call.1} parent=1 // pred_check
      _
    $region47: #{tpu_custom_call.1} parent=1 // pred_check_branch
      %125 = sbr.rel (0) target = $region49
    $region48: #{tpu_custom_call.1} parent=1 // pred_region
      %126 = dma.done [#allocation6], 96
    $region49: #{tpu_custom_call.1} parent=1 // pred_fallthru
      _
    // Predicated region
    $region50: #{tpu_custom_call.1} parent=1 // pred_check
      _
    $region51: #{tpu_custom_call.1} parent=1 // pred_check_branch
      %128 = sbr.rel (0) target = $region53
    $region52: #{tpu_custom_call.1} parent=1 // pred_region
      %129 = dma.done [#allocation9], 73728
    $region53: #{tpu_custom_call.1} parent=1 // pred_fallthru
      _
    // Predicated region
    $region54: #{tpu_custom_call.1} parent=1 // pred_check
      _
    $region55: #{tpu_custom_call.1} parent=1 // pred_check_branch
      %131 = sbr.rel (0) target = $region57
    $region56: #{tpu_custom_call.1} parent=1 // pred_region
      %132 = dma.done [#allocation9], 96
    $region57: #{tpu_custom_call.1} parent=1 // pred_fallthru
      _
    // Predicated region
    $region58: #{tpu_custom_call.1} parent=1 // pred_check
      _
    $region59: #{tpu_custom_call.1} parent=1 // pred_check_branch
      %134 = sbr.rel (0) target = $region61
    $region60: #{tpu_custom_call.1} parent=1 // pred_region
      %135 = dma.done [#allocation12], 12288
    $region61: #{tpu_custom_call.1} parent=1 // pred_fallthru
      _
    // Predicated region
    $region62: #{tpu_custom_call.1} parent=1 // pred_check
      _
    $region63: #{tpu_custom_call.1} parent=1 // pred_check_branch
      %137 = sbr.rel (0) target = $region65
    $region64: #{tpu_custom_call.1} parent=1 // pred_region
      %138 = dma.done [#allocation12], 16
    $region65: #{tpu_custom_call.1} parent=1 // pred_fallthru
      _
    // Predicated region
    $region66: #{tpu_custom_call.1} parent=1 // pred_check
      _
    $region67: #{tpu_custom_call.1} parent=1 // pred_check_branch
      %140 = sbr.rel (0) target = $region69
    $region68: #{tpu_custom_call.1} parent=1 // pred_region
      %141 = dma.done [#allocation15], 2048
    $region69: #{tpu_custom_call.1} parent=1 // pred_fallthru
      _
    // Predicated region
    $region70: #{tpu_custom_call.1} parent=1 // pred_check
      _
    $region71: #{tpu_custom_call.1} parent=1 // pred_check_branch
      %143 = sbr.rel (0) target = $region73
    $region72: #{tpu_custom_call.1} parent=1 // pred_region
      %144 = dma.done [#allocation15], 16
    $region73: #{tpu_custom_call.1} parent=1 // pred_fallthru
      _
    %v145 = vld [vmem:[#allocation2] sm:$0xff]
    %v146 = vld [vmem:[#allocation5] sm:$0xff]
    %v147 = vld [vmem:[#allocation5 + $0x8] sm:$0xff]
    %v148 = vld [vmem:[#allocation5 + $0x10] sm:$0xff]
    %v149 = vld [vmem:[#allocation5 + $0x18] sm:$0xff]
    %v150 = vld [vmem:[#allocation5 + $0x20] sm:$0xff]
    %v151 = vld [vmem:[#allocation5 + $0x28] sm:$0xff]
    %v152 = vld [vmem:[#allocation5 + $0x30] sm:$0xff]
    %v153 = vld [vmem:[#allocation5 + $0x38] sm:$0xff]
    %v154 = vld [vmem:[#allocation5 + $0x40] sm:$0xff]
    %v155 = vld [vmem:[#allocation5 + $0x48] sm:$0xff]
    %v156 = vld [vmem:[#allocation5 + $0x50] sm:$0xff]
    %v157 = vld [vmem:[#allocation5 + $0x58] sm:$0xff]
    %v158 = vld [vmem:[#allocation5 + $0x60] sm:$0xff]
    %v159 = vld [vmem:[#allocation5 + $0x68] sm:$0xff]
    %v160 = vld [vmem:[#allocation5 + $0x70] sm:$0xff]
    %v161 = vld [vmem:[#allocation5 + $0x78] sm:$0xff]
    %v162 = vld [vmem:[#allocation5 + $0x80] sm:$0xff]
    %v163 = vld [vmem:[#allocation5 + $0x88] sm:$0xff]
    %v164 = vld [vmem:[#allocation5 + $0x90] sm:$0xff]
    %v165 = vld [vmem:[#allocation5 + $0x98] sm:$0xff]
    %v166 = vld [vmem:[#allocation5 + $0xa0] sm:$0xff]
    %v167 = vld [vmem:[#allocation5 + $0xa8] sm:$0xff]
    %v168 = vld [vmem:[#allocation5 + $0xb0] sm:$0xff]
    %v169 = vld [vmem:[#allocation5 + $0xb8] sm:$0xff]
    %v170 = vld [vmem:[#allocation5 + $0xc0] sm:$0xff]
    %v171 = vld [vmem:[#allocation5 + $0xc8] sm:$0xff]
    %v172 = vld [vmem:[#allocation5 + $0xd0] sm:$0xff]
    %v173 = vld [vmem:[#allocation5 + $0xd8] sm:$0xff]
    %v174 = vld [vmem:[#allocation5 + $0xe0] sm:$0xff]
    %v175 = vld [vmem:[#allocation5 + $0xe8] sm:$0xff]
    %v176 = vld [vmem:[#allocation5 + $0xf0] sm:$0xff]
    %v177 = vld [vmem:[#allocation5 + $0xf8] sm:$0xff]
    %v178 = vld [vmem:[#allocation5 + $0x100] sm:$0xff]
    %v179 = vld [vmem:[#allocation5 + $0x108] sm:$0xff]
    %v180 = vld [vmem:[#allocation5 + $0x110] sm:$0xff]
    %v181 = vld [vmem:[#allocation5 + $0x118] sm:$0xff]
    %v182 = vld [vmem:[#allocation5 + $0x120] sm:$0xff]
    %v183 = vld [vmem:[#allocation5 + $0x128] sm:$0xff]
    %v184 = vld [vmem:[#allocation5 + $0x130] sm:$0xff]
    %v185 = vld [vmem:[#allocation5 + $0x138] sm:$0xff]
    %v186 = vld [vmem:[#allocation5 + $0x140] sm:$0xff]
    %v187 = vld [vmem:[#allocation5 + $0x148] sm:$0xff]
    %v188 = vld [vmem:[#allocation5 + $0x150] sm:$0xff]
    %v189 = vld [vmem:[#allocation5 + $0x158] sm:$0xff]
    %v190 = vld [vmem:[#allocation5 + $0x160] sm:$0xff]
    %v191 = vld [vmem:[#allocation5 + $0x168] sm:$0xff]
    %v192 = vld [vmem:[#allocation5 + $0x170] sm:$0xff]
    %v193 = vld [vmem:[#allocation5 + $0x178] sm:$0xff]
    %v194 = vld [vmem:[#allocation5 + $0x180] sm:$0xff]
    %v195 = vld [vmem:[#allocation5 + $0x188] sm:$0xff]
    %v196 = vld [vmem:[#allocation5 + $0x190] sm:$0xff]
    %v197 = vld [vmem:[#allocation5 + $0x198] sm:$0xff]
    %v198 = vld [vmem:[#allocation5 + $0x1a0] sm:$0xff]
    %v199 = vld [vmem:[#allocation5 + $0x1a8] sm:$0xff]
    %v200 = vld [vmem:[#allocation5 + $0x1b0] sm:$0xff]
    %v201 = vld [vmem:[#allocation5 + $0x1b8] sm:$0xff]
    %v202 = vld [vmem:[#allocation5 + $0x1c0] sm:$0xff]
    %v203 = vld [vmem:[#allocation5 + $0x1c8] sm:$0xff]
    %v204 = vld [vmem:[#allocation5 + $0x1d0] sm:$0xff]
    %v205 = vld [vmem:[#allocation5 + $0x1d8] sm:$0xff]
    %v206 = vld [vmem:[#allocation5 + $0x1e0] sm:$0xf]
    %v207 = vld [vmem:[#allocation5 + $0x1e8] sm:$0xf]
    %v208 = vld [vmem:[#allocation5 + $0x1f0] sm:$0xf]
    %v209 = vld [vmem:[#allocation5 + $0x1f8] sm:$0xf]
    %v210 = vld [vmem:[#allocation5 + $0x200] sm:$0xf]
    %v211 = vld [vmem:[#allocation5 + $0x208] sm:$0xf]
    %v212 = vld [vmem:[#allocation7] sm:$0x3f]
    %v214 = vlaneseq
    %v215 = vshrl.u32 %v214, 7
    %v216 = vsub.s32 0, %v215
    %v217 = vrot.slane %v212, %v216
    %v218 = vlaneseq
    %v219 = vshrl.u32 %v218, 7
    %v220 = vsub.s32 1, %v219
    %v221 = vrot.slane %v212, %v220
    %v222 = vlaneseq
    %v223 = vshrl.u32 %v222, 7
    %v224 = vsub.s32 2, %v223
    %v225 = vrot.slane %v212, %v224
    %v226 = vlaneseq
    %v227 = vshrl.u32 %v226, 7
    %v228 = vsub.s32 3, %v227
    %v229 = vrot.slane %v212, %v228
    %v230 = vlaneseq
    %v231 = vshrl.u32 %v230, 7
    %v232 = vsub.s32 4, %v231
    %v233 = vrot.slane %v212, %v232
    %v234 = vlaneseq
    %v235 = vshrl.u32 %v234, 7
    %v236 = vsub.s32 5, %v235
    %v237 = vrot.slane %v212, %v236
    %vm244 = vcmask 687104
    %v246 = vsel %vm244, %v145, 0
    %vm248 = vcmask 1043456
    %v250 = vsel %vm248, %v206, 0
    %v253 = vsel %vm248, %v207, 0
    %v256 = vsel %vm248, %v208, 0
    %v259 = vsel %vm248, %v209, 0
    %v262 = vsel %vm248, %v210, 0
    %v265 = vsel %vm248, %v211, 0
    %267 = vmatprep.subr.mxu0 %v147
    %268 = vmatpush1.msra.mxu0 %v146
    %269 = vmatprep.subr.mxu0 %v153
    %270 = vmatpush1.msra.mxu0 %v152
    %271 = vmatprep.subr.mxu0 %v159
    %272 = vmatpush1.msra.mxu0 %v158
    %273 = vmatprep.subr.mxu0 %v165
    %274 = vmatpush1.msra.mxu0 %v164
    %275 = vmatprep.subr.mxu0 %v171
    %276 = vmatpush1.msra.mxu0 %v170
    %277 = vmatprep.subr.mxu0 %v177
    %278 = vmatpush1.msra.mxu0 %v176
    %279 = vmatprep.subr.mxu0 %v183
    %280 = vmatpush1.msra.mxu0 %v182
    %281 = vmatprep.subr.mxu0 %v189
    %282 = vmatpush1.msra.mxu0 %v188
    %283 = vmatprep.subr.mxu0 %v195
    %284 = vmatpush1.msra.mxu0 %v194
    %285 = vmatprep.subr.mxu0 %v201
    %286 = vmatpush1.msra.mxu0 %v200
    %287 = vmatprep.subr.mxu0 %v253
    %288 = vmatpush1.msra.mxu0 %v250
    %289 = vmatprep.subr.mxu0 0.0
    %290 = vmatpush1.msra.mxu0 0.0
    %291 = vmatprep.subr.mxu0 0.0
    %292 = vmatpush1.msra.mxu0 0.0
    %293 = vmatprep.subr.mxu0 0.0
    %294 = vmatpush1.msra.mxu0 0.0
    %295 = vmatprep.subr.mxu0 0.0
    %296 = vmatpush1.msra.mxu0 0.0
    %297 = vmatprep.subr.mxu0 0.0
    %298 = vmatpush1.msra.mxu0 0.0
    %299 = vmatprep.subr.mxu0 0.0
    %300 = vmatpush1.msra.mxu0 0.0
    %301 = vmatprep.subr.mxu0 0.0
    %302 = vmatpush1.msra.mxu0 0.0
    %303 = vmatprep.subr.mxu0 0.0
    %304 = vmatpush1.msra.mxu0 0.0
    %305 = vmatprep.subr.mxu0 0.0
    %306 = vmatpush1.msra.mxu0 0.0
    %307 = vmatprep.subr.mxu0 0.0
    %308 = vmatpush1.msra.mxu0 0.0
    %309 = vmatprep.subr.mxu0 0.0
    %310 = vmatpush1.msra.mxu0 0.0
    %311 = vmatprep.subr.mxu0 0.0
    %312 = vmatpush1.msra.mxu0 0.0
    %313 = vmatprep.subr.mxu0 0.0
    %314 = vmatpush1.msra.mxu0 0.0
    %315 = vmatprep.subr.mxu0 0.0
    %316 = vmatpush1.msra.mxu0 0.0
    %317 = vmatprep.subr.mxu0 0.0
    %318 = vmatpush1.msra.mxu0 0.0
    %319 = vmatprep.subr.mxu0 0.0
    %320 = vmatpush1.msra.mxu0 0.0
    %321 = vmatprep.subr.mxu0 0.0
    %322 = vmatpush1.msra.mxu0 0.0
    %323 = vmatprep.subr.mxu0 0.0
    %324 = vmatpush1.msra.mxu0 0.0
    %325 = vmatprep.subr.mxu0 0.0
    %326 = vmatpush1.msra.mxu0 0.0
    %327 = vmatprep.subr.mxu0 0.0
    %328 = vmatpush1.msra.mxu0 0.0
    %329 = vmatprep.subr.mxu0 0.0
    %330 = vmatpush1.msra.mxu0 0.0
    %331 = vmatprep.mubr.f32.mxu0 0.0
    %332 = vmatmul.mubr.f32.gmra.mrb[0].mxu0 %v246
    %v333 = vpop.f32.mrb[0].mxu0
    %v334 = vadd.f32 %v217, %v333
    %v335 = vpop.f32.mrb[0].mxu0
    %v336 = vadd.f32 %v221, %v335
    %337 = vdwg.mxu0
    %338 = vmatprep.subr.mxu0 %v149
    %339 = vmatpush1.msra.mxu0 %v148
    %340 = vmatprep.subr.mxu0 %v155
    %341 = vmatpush1.msra.mxu0 %v154
    %342 = vmatprep.subr.mxu0 %v161
    %343 = vmatpush1.msra.mxu0 %v160
    %344 = vmatprep.subr.mxu0 %v167
    %345 = vmatpush1.msra.mxu0 %v166
    %346 = vmatprep.subr.mxu0 %v173
    %347 = vmatpush1.msra.mxu0 %v172
    %348 = vmatprep.subr.mxu0 %v179
    %349 = vmatpush1.msra.mxu0 %v178
    %350 = vmatprep.subr.mxu0 %v185
    %351 = vmatpush1.msra.mxu0 %v184
    %352 = vmatprep.subr.mxu0 %v191
    %353 = vmatpush1.msra.mxu0 %v190
    %354 = vmatprep.subr.mxu0 %v197
    %355 = vmatpush1.msra.mxu0 %v196
    %356 = vmatprep.subr.mxu0 %v203
    %357 = vmatpush1.msra.mxu0 %v202
    %358 = vmatprep.subr.mxu0 %v259
    %359 = vmatpush1.msra.mxu0 %v256
    %360 = vmatprep.subr.mxu0 0.0
    %361 = vmatpush1.msra.mxu0 0.0
    %362 = vmatprep.subr.mxu0 0.0
    %363 = vmatpush1.msra.mxu0 0.0
    %364 = vmatprep.subr.mxu0 0.0
    %365 = vmatpush1.msra.mxu0 0.0
    %366 = vmatprep.subr.mxu0 0.0
    %367 = vmatpush1.msra.mxu0 0.0
    %368 = vmatprep.subr.mxu0 0.0
    %369 = vmatpush1.msra.mxu0 0.0
    %370 = vmatprep.subr.mxu0 0.0
    %371 = vmatpush1.msra.mxu0 0.0
    %372 = vmatprep.subr.mxu0 0.0
    %373 = vmatpush1.msra.mxu0 0.0
    %374 = vmatprep.subr.mxu0 0.0
    %375 = vmatpush1.msra.mxu0 0.0
    %376 = vmatprep.subr.mxu0 0.0
    %377 = vmatpush1.msra.mxu0 0.0
    %378 = vmatprep.subr.mxu0 0.0
    %379 = vmatpush1.msra.mxu0 0.0
    %380 = vmatprep.subr.mxu0 0.0
    %381 = vmatpush1.msra.mxu0 0.0
    %382 = vmatprep.subr.mxu0 0.0
    %383 = vmatpush1.msra.mxu0 0.0
    %384 = vmatprep.subr.mxu0 0.0
    %385 = vmatpush1.msra.mxu0 0.0
    %386 = vmatprep.subr.mxu0 0.0
    %387 = vmatpush1.msra.mxu0 0.0
    %388 = vmatprep.subr.mxu0 0.0
    %389 = vmatpush1.msra.mxu0 0.0
    %390 = vmatprep.subr.mxu0 0.0
    %391 = vmatpush1.msra.mxu0 0.0
    %392 = vmatprep.subr.mxu0 0.0
    %393 = vmatpush1.msra.mxu0 0.0
    %394 = vmatprep.subr.mxu0 0.0
    %395 = vmatpush1.msra.mxu0 0.0
    %396 = vmatprep.subr.mxu0 0.0
    %397 = vmatpush1.msra.mxu0 0.0
    %398 = vmatprep.subr.mxu0 0.0
    %399 = vmatpush1.msra.mxu0 0.0
    %400 = vmatprep.subr.mxu0 0.0
    %401 = vmatpush1.msra.mxu0 0.0
    %402 = vmatprep.mubr.f32.mxu0 0.0
    %403 = vmatmul.mubr.f32.gmra.mrb[0].mxu0 %v246
    %v404 = vpop.f32.mrb[0].mxu0
    %v405 = vadd.f32 %v225, %v404
    %v406 = vpop.f32.mrb[0].mxu0
    %v407 = vadd.f32 %v229, %v406
    %408 = vdwg.mxu0
    %409 = vmatprep.subr.mxu0 %v151
    %410 = vmatpush1.msra.mxu0 %v150
    %411 = vmatprep.subr.mxu0 %v157
    %412 = vmatpush1.msra.mxu0 %v156
    %413 = vmatprep.subr.mxu0 %v163
    %414 = vmatpush1.msra.mxu0 %v162
    %415 = vmatprep.subr.mxu0 %v169
    %416 = vmatpush1.msra.mxu0 %v168
    %417 = vmatprep.subr.mxu0 %v175
    %418 = vmatpush1.msra.mxu0 %v174
    %419 = vmatprep.subr.mxu0 %v181
    %420 = vmatpush1.msra.mxu0 %v180
    %421 = vmatprep.subr.mxu0 %v187
    %422 = vmatpush1.msra.mxu0 %v186
    %423 = vmatprep.subr.mxu0 %v193
    %424 = vmatpush1.msra.mxu0 %v192
    %425 = vmatprep.subr.mxu0 %v199
    %426 = vmatpush1.msra.mxu0 %v198
    %427 = vmatprep.subr.mxu0 %v205
    %428 = vmatpush1.msra.mxu0 %v204
    %429 = vmatprep.subr.mxu0 %v265
    %430 = vmatpush1.msra.mxu0 %v262
    %431 = vmatprep.subr.mxu0 0.0
    %432 = vmatpush1.msra.mxu0 0.0
    %433 = vmatprep.subr.mxu0 0.0
    %434 = vmatpush1.msra.mxu0 0.0
    %435 = vmatprep.subr.mxu0 0.0
    %436 = vmatpush1.msra.mxu0 0.0
    %437 = vmatprep.subr.mxu0 0.0
    %438 = vmatpush1.msra.mxu0 0.0
    %439 = vmatprep.subr.mxu0 0.0
    %440 = vmatpush1.msra.mxu0 0.0
    %441 = vmatprep.subr.mxu0 0.0
    %442 = vmatpush1.msra.mxu0 0.0
    %443 = vmatprep.subr.mxu0 0.0
    %444 = vmatpush1.msra.mxu0 0.0
    %445 = vmatprep.subr.mxu0 0.0
    %446 = vmatpush1.msra.mxu0 0.0
    %447 = vmatprep.subr.mxu0 0.0
    %448 = vmatpush1.msra.mxu0 0.0
    %449 = vmatprep.subr.mxu0 0.0
    %450 = vmatpush1.msra.mxu0 0.0
    %451 = vmatprep.subr.mxu0 0.0
    %452 = vmatpush1.msra.mxu0 0.0
    %453 = vmatprep.subr.mxu0 0.0
    %454 = vmatpush1.msra.mxu0 0.0
    %455 = vmatprep.subr.mxu0 0.0
    %456 = vmatpush1.msra.mxu0 0.0
    %457 = vmatprep.subr.mxu0 0.0
    %458 = vmatpush1.msra.mxu0 0.0
    %459 = vmatprep.subr.mxu0 0.0
    %460 = vmatpush1.msra.mxu0 0.0
    %461 = vmatprep.subr.mxu0 0.0
    %462 = vmatpush1.msra.mxu0 0.0
    %463 = vmatprep.subr.mxu0 0.0
    %464 = vmatpush1.msra.mxu0 0.0
    %465 = vmatprep.subr.mxu0 0.0
    %466 = vmatpush1.msra.mxu0 0.0
    %467 = vmatprep.subr.mxu0 0.0
    %468 = vmatpush1.msra.mxu0 0.0
    %469 = vmatprep.subr.mxu0 0.0
    %470 = vmatpush1.msra.mxu0 0.0
    %471 = vmatprep.subr.mxu0 0.0
    %472 = vmatpush1.msra.mxu0 0.0
    %473 = vmatprep.mubr.f32.mxu0 0.0
    %474 = vmatmul.mubr.f32.gmra.mrb[0].mxu0 %v246
    %v475 = vpop.f32.mrb[0].mxu0
    %v476 = vadd.f32 %v233, %v475
    %v477 = vpop.f32.mrb[0].mxu0
    %v478 = vadd.f32 %v237, %v477
    %479 = vdwg.mxu0
    %v480 = vmax.f32 %v334, 0.0
    %v481 = vmax.f32 %v336, 0.0
    %v482 = vmax.f32 %v405, 0.0
    %v483 = vmax.f32 %v407, 0.0
    %v484 = vmax.f32 %v476, 0.0
    %v485 = vmax.f32 %v478, 0.0
    %v486 = vld [vmem:[#allocation8] sm:$0xff]
    %v487 = vld [vmem:[#allocation8 + $0x8] sm:$0xff]
    %v488 = vld [vmem:[#allocation8 + $0x10] sm:$0xff]
    %v489 = vld [vmem:[#allocation8 + $0x18] sm:$0xff]
    %v490 = vld [vmem:[#allocation8 + $0x20] sm:$0xff]
    %v491 = vld [vmem:[#allocation8 + $0x28] sm:$0xff]
    %v492 = vld [vmem:[#allocation8 + $0x30] sm:$0xff]
    %v493 = vld [vmem:[#allocation8 + $0x38] sm:$0xff]
    %v494 = vld [vmem:[#allocation8 + $0x40] sm:$0xff]
    %v495 = vld [vmem:[#allocation8 + $0x48] sm:$0xff]
    %v496 = vld [vmem:[#allocation8 + $0x50] sm:$0xff]
    %v497 = vld [vmem:[#allocation8 + $0x58] sm:$0xff]
    %v498 = vld [vmem:[#allocation8 + $0x60] sm:$0xff]
    %v499 = vld [vmem:[#allocation8 + $0x68] sm:$0xff]
    %v500 = vld [vmem:[#allocation8 + $0x70] sm:$0xff]
    %v501 = vld [vmem:[#allocation8 + $0x78] sm:$0xff]
    %v502 = vld [vmem:[#allocation8 + $0x80] sm:$0xff]
    %v503 = vld [vmem:[#allocation8 + $0x88] sm:$0xff]
    %v504 = vld [vmem:[#allocation8 + $0x90] sm:$0xff]
    %v505 = vld [vmem:[#allocation8 + $0x98] sm:$0xff]
    %v506 = vld [vmem:[#allocation8 + $0xa0] sm:$0xff]
    %v507 = vld [vmem:[#allocation8 + $0xa8] sm:$0xff]
    %v508 = vld [vmem:[#allocation8 + $0xb0] sm:$0xff]
    %v509 = vld [vmem:[#allocation8 + $0xb8] sm:$0xff]
    %v510 = vld [vmem:[#allocation8 + $0xc0] sm:$0xff]
    %v511 = vld [vmem:[#allocation8 + $0xc8] sm:$0xff]
    %v512 = vld [vmem:[#allocation8 + $0xd0] sm:$0xff]
    %v513 = vld [vmem:[#allocation8 + $0xd8] sm:$0xff]
    %v514 = vld [vmem:[#allocation8 + $0xe0] sm:$0xff]
    %v515 = vld [vmem:[#allocation8 + $0xe8] sm:$0xff]
    %v516 = vld [vmem:[#allocation8 + $0xf0] sm:$0xff]
    %v517 = vld [vmem:[#allocation8 + $0xf8] sm:$0xff]
    %v518 = vld [vmem:[#allocation8 + $0x100] sm:$0xff]
    %v519 = vld [vmem:[#allocation8 + $0x108] sm:$0xff]
    %v520 = vld [vmem:[#allocation8 + $0x110] sm:$0xff]
    %v521 = vld [vmem:[#allocation8 + $0x118] sm:$0xff]
    %v522 = vld [vmem:[#allocation8 + $0x120] sm:$0xff]
    %v523 = vld [vmem:[#allocation8 + $0x128] sm:$0xff]
    %v524 = vld [vmem:[#allocation8 + $0x130] sm:$0xff]
    %v525 = vld [vmem:[#allocation8 + $0x138] sm:$0xff]
    %v526 = vld [vmem:[#allocation8 + $0x140] sm:$0xff]
    %v527 = vld [vmem:[#allocation8 + $0x148] sm:$0xff]
    %v528 = vld [vmem:[#allocation8 + $0x150] sm:$0xff]
    %v529 = vld [vmem:[#allocation8 + $0x158] sm:$0xff]
    %v530 = vld [vmem:[#allocation8 + $0x160] sm:$0xff]
    %v531 = vld [vmem:[#allocation8 + $0x168] sm:$0xff]
    %v532 = vld [vmem:[#allocation8 + $0x170] sm:$0xff]
    %v533 = vld [vmem:[#allocation8 + $0x178] sm:$0xff]
    %v534 = vld [vmem:[#allocation8 + $0x180] sm:$0xff]
    %v535 = vld [vmem:[#allocation8 + $0x188] sm:$0xff]
    %v536 = vld [vmem:[#allocation8 + $0x190] sm:$0xff]
    %v537 = vld [vmem:[#allocation8 + $0x198] sm:$0xff]
    %v538 = vld [vmem:[#allocation8 + $0x1a0] sm:$0xff]
    %v539 = vld [vmem:[#allocation8 + $0x1a8] sm:$0xff]
    %v540 = vld [vmem:[#allocation8 + $0x1b0] sm:$0xff]
    %v541 = vld [vmem:[#allocation8 + $0x1b8] sm:$0xff]
    %v542 = vld [vmem:[#allocation8 + $0x1c0] sm:$0xff]
    %v543 = vld [vmem:[#allocation8 + $0x1c8] sm:$0xff]
    %v544 = vld [vmem:[#allocation8 + $0x1d0] sm:$0xff]
    %v545 = vld [vmem:[#allocation8 + $0x1d8] sm:$0xff]
    %v546 = vld [vmem:[#allocation8 + $0x1e0] sm:$0xff]
    %v547 = vld [vmem:[#allocation8 + $0x1e8] sm:$0xff]
    %v548 = vld [vmem:[#allocation8 + $0x1f0] sm:$0xff]
    %v549 = vld [vmem:[#allocation8 + $0x1f8] sm:$0xff]
    %v550 = vld [vmem:[#allocation8 + $0x200] sm:$0xff]
    %v551 = vld [vmem:[#allocation8 + $0x208] sm:$0xff]
    %v552 = vld [vmem:[#allocation8 + $0x210] sm:$0xff]
    %v553 = vld [vmem:[#allocation8 + $0x218] sm:$0xff]
    %v554 = vld [vmem:[#allocation8 + $0x220] sm:$0xff]
    %v555 = vld [vmem:[#allocation8 + $0x228] sm:$0xff]
    %v556 = vld [vmem:[#allocation8 + $0x230] sm:$0xff]
    %v557 = vld [vmem:[#allocation8 + $0x238] sm:$0xff]
    %v558 = vld [vmem:[#allocation8 + $0x240] sm:$0xff]
    %v559 = vld [vmem:[#allocation8 + $0x248] sm:$0xff]
    %v560 = vld [vmem:[#allocation8 + $0x250] sm:$0xff]
    %v561 = vld [vmem:[#allocation8 + $0x258] sm:$0xff]
    %v562 = vld [vmem:[#allocation8 + $0x260] sm:$0xff]
    %v563 = vld [vmem:[#allocation8 + $0x268] sm:$0xff]
    %v564 = vld [vmem:[#allocation8 + $0x270] sm:$0xff]
    %v565 = vld [vmem:[#allocation8 + $0x278] sm:$0xff]
    %v566 = vld [vmem:[#allocation8 + $0x280] sm:$0xff]
    %v567 = vld [vmem:[#allocation8 + $0x288] sm:$0xff]
    %v568 = vld [vmem:[#allocation8 + $0x290] sm:$0xff]
    %v569 = vld [vmem:[#allocation8 + $0x298] sm:$0xff]
    %v570 = vld [vmem:[#allocation8 + $0x2a0] sm:$0xff]
    %v571 = vld [vmem:[#allocation8 + $0x2a8] sm:$0xff]
    %v572 = vld [vmem:[#allocation8 + $0x2b0] sm:$0xff]
    %v573 = vld [vmem:[#allocation8 + $0x2b8] sm:$0xff]
    %v574 = vld [vmem:[#allocation8 + $0x2c0] sm:$0xff]
    %v575 = vld [vmem:[#allocation8 + $0x2c8] sm:$0xff]
    %v576 = vld [vmem:[#allocation8 + $0x2d0] sm:$0xff]
    %v577 = vld [vmem:[#allocation8 + $0x2d8] sm:$0xff]
    %v578 = vld [vmem:[#allocation8 + $0x2e0] sm:$0xff]
    %v579 = vld [vmem:[#allocation8 + $0x2e8] sm:$0xff]
    %v580 = vld [vmem:[#allocation8 + $0x2f0] sm:$0xff]
    %v581 = vld [vmem:[#allocation8 + $0x2f8] sm:$0xff]
    %v582 = vld [vmem:[#allocation8 + $0x300] sm:$0xff]
    %v583 = vld [vmem:[#allocation8 + $0x308] sm:$0xff]
    %v584 = vld [vmem:[#allocation8 + $0x310] sm:$0xff]
    %v585 = vld [vmem:[#allocation8 + $0x318] sm:$0xff]
    %v586 = vld [vmem:[#allocation8 + $0x320] sm:$0xff]
    %v587 = vld [vmem:[#allocation8 + $0x328] sm:$0xff]
    %v588 = vld [vmem:[#allocation8 + $0x330] sm:$0xff]
    %v589 = vld [vmem:[#allocation8 + $0x338] sm:$0xff]
    %v590 = vld [vmem:[#allocation8 + $0x340] sm:$0xff]
    %v591 = vld [vmem:[#allocation8 + $0x348] sm:$0xff]
    %v592 = vld [vmem:[#allocation8 + $0x350] sm:$0xff]
    %v593 = vld [vmem:[#allocation8 + $0x358] sm:$0xff]
    %v594 = vld [vmem:[#allocation8 + $0x360] sm:$0xff]
    %v595 = vld [vmem:[#allocation8 + $0x368] sm:$0xff]
    %v596 = vld [vmem:[#allocation8 + $0x370] sm:$0xff]
    %v597 = vld [vmem:[#allocation8 + $0x378] sm:$0xff]
    %v598 = vld [vmem:[#allocation8 + $0x380] sm:$0xff]
    %v599 = vld [vmem:[#allocation8 + $0x388] sm:$0xff]
    %v600 = vld [vmem:[#allocation8 + $0x390] sm:$0xff]
    %v601 = vld [vmem:[#allocation8 + $0x398] sm:$0xff]
    %v602 = vld [vmem:[#allocation8 + $0x3a0] sm:$0xff]
    %v603 = vld [vmem:[#allocation8 + $0x3a8] sm:$0xff]
    %v604 = vld [vmem:[#allocation8 + $0x3b0] sm:$0xff]
    %v605 = vld [vmem:[#allocation8 + $0x3b8] sm:$0xff]
    %v606 = vld [vmem:[#allocation8 + $0x3c0] sm:$0xff]
    %v607 = vld [vmem:[#allocation8 + $0x3c8] sm:$0xff]
    %v608 = vld [vmem:[#allocation8 + $0x3d0] sm:$0xff]
    %v609 = vld [vmem:[#allocation8 + $0x3d8] sm:$0xff]
    %v610 = vld [vmem:[#allocation8 + $0x3e0] sm:$0xff]
    %v611 = vld [vmem:[#allocation8 + $0x3e8] sm:$0xff]
    %v612 = vld [vmem:[#allocation8 + $0x3f0] sm:$0xff]
    %v613 = vld [vmem:[#allocation8 + $0x3f8] sm:$0xff]
    %v614 = vld [vmem:[#allocation8 + $0x400] sm:$0xff]
    %v615 = vld [vmem:[#allocation8 + $0x408] sm:$0xff]
    %v616 = vld [vmem:[#allocation8 + $0x410] sm:$0xff]
    %v617 = vld [vmem:[#allocation8 + $0x418] sm:$0xff]
    %v618 = vld [vmem:[#allocation8 + $0x420] sm:$0xff]
    %v619 = vld [vmem:[#allocation8 + $0x428] sm:$0xff]
    %v620 = vld [vmem:[#allocation8 + $0x430] sm:$0xff]
    %v621 = vld [vmem:[#allocation8 + $0x438] sm:$0xff]
    %v622 = vld [vmem:[#allocation8 + $0x440] sm:$0xff]
    %v623 = vld [vmem:[#allocation8 + $0x448] sm:$0xff]
    %v624 = vld [vmem:[#allocation8 + $0x450] sm:$0xff]
    %v625 = vld [vmem:[#allocation8 + $0x458] sm:$0xff]
    %v626 = vld [vmem:[#allocation8 + $0x460] sm:$0xff]
    %v627 = vld [vmem:[#allocation8 + $0x468] sm:$0xff]
    %v628 = vld [vmem:[#allocation8 + $0x470] sm:$0xff]
    %v629 = vld [vmem:[#allocation8 + $0x478] sm:$0xff]
    %v630 = vld [vmem:[#allocation8 + $0x480] sm:$0xff]
    %v631 = vld [vmem:[#allocation8 + $0x488] sm:$0xff]
    %v632 = vld [vmem:[#allocation8 + $0x490] sm:$0xff]
    %v633 = vld [vmem:[#allocation8 + $0x498] sm:$0xff]
    %v634 = vld [vmem:[#allocation8 + $0x4a0] sm:$0xff]
    %v635 = vld [vmem:[#allocation8 + $0x4a8] sm:$0xff]
    %v636 = vld [vmem:[#allocation8 + $0x4b0] sm:$0xff]
    %v637 = vld [vmem:[#allocation8 + $0x4b8] sm:$0xff]
    %v638 = vld [vmem:[#allocation8 + $0x4c0] sm:$0xff]
    %v639 = vld [vmem:[#allocation8 + $0x4c8] sm:$0xff]
    %v640 = vld [vmem:[#allocation8 + $0x4d0] sm:$0xff]
    %v641 = vld [vmem:[#allocation8 + $0x4d8] sm:$0xff]
    %v642 = vld [vmem:[#allocation8 + $0x4e0] sm:$0xff]
    %v643 = vld [vmem:[#allocation8 + $0x4e8] sm:$0xff]
    %v644 = vld [vmem:[#allocation8 + $0x4f0] sm:$0xff]
    %v645 = vld [vmem:[#allocation8 + $0x4f8] sm:$0xff]
    %v646 = vld [vmem:[#allocation8 + $0x500] sm:$0xff]
    %v647 = vld [vmem:[#allocation8 + $0x508] sm:$0xff]
    %v648 = vld [vmem:[#allocation8 + $0x510] sm:$0xff]
    %v649 = vld [vmem:[#allocation8 + $0x518] sm:$0xff]
    %v650 = vld [vmem:[#allocation8 + $0x520] sm:$0xff]
    %v651 = vld [vmem:[#allocation8 + $0x528] sm:$0xff]
    %v652 = vld [vmem:[#allocation8 + $0x530] sm:$0xff]
    %v653 = vld [vmem:[#allocation8 + $0x538] sm:$0xff]
    %v654 = vld [vmem:[#allocation8 + $0x540] sm:$0xff]
    %v655 = vld [vmem:[#allocation8 + $0x548] sm:$0xff]
    %v656 = vld [vmem:[#allocation8 + $0x550] sm:$0xff]
    %v657 = vld [vmem:[#allocation8 + $0x558] sm:$0xff]
    %v658 = vld [vmem:[#allocation8 + $0x560] sm:$0xff]
    %v659 = vld [vmem:[#allocation8 + $0x568] sm:$0xff]
    %v660 = vld [vmem:[#allocation8 + $0x570] sm:$0xff]
    %v661 = vld [vmem:[#allocation8 + $0x578] sm:$0xff]
    %v662 = vld [vmem:[#allocation8 + $0x580] sm:$0xff]
    %v663 = vld [vmem:[#allocation8 + $0x588] sm:$0xff]
    %v664 = vld [vmem:[#allocation8 + $0x590] sm:$0xff]
    %v665 = vld [vmem:[#allocation8 + $0x598] sm:$0xff]
    %v666 = vld [vmem:[#allocation8 + $0x5a0] sm:$0xff]
    %v667 = vld [vmem:[#allocation8 + $0x5a8] sm:$0xff]
    %v668 = vld [vmem:[#allocation8 + $0x5b0] sm:$0xff]
    %v669 = vld [vmem:[#allocation8 + $0x5b8] sm:$0xff]
    %v670 = vld [vmem:[#allocation8 + $0x5c0] sm:$0xff]
    %v671 = vld [vmem:[#allocation8 + $0x5c8] sm:$0xff]
    %v672 = vld [vmem:[#allocation8 + $0x5d0] sm:$0xff]
    %v673 = vld [vmem:[#allocation8 + $0x5d8] sm:$0xff]
    %v674 = vld [vmem:[#allocation8 + $0x5e0] sm:$0xff]
    %v675 = vld [vmem:[#allocation8 + $0x5e8] sm:$0xff]
    %v676 = vld [vmem:[#allocation8 + $0x5f0] sm:$0xff]
    %v677 = vld [vmem:[#allocation8 + $0x5f8] sm:$0xff]
    %v678 = vld [vmem:[#allocation8 + $0x600] sm:$0xff]
    %v679 = vld [vmem:[#allocation8 + $0x608] sm:$0xff]
    %v680 = vld [vmem:[#allocation8 + $0x610] sm:$0xff]
    %v681 = vld [vmem:[#allocation8 + $0x618] sm:$0xff]
    %v682 = vld [vmem:[#allocation8 + $0x620] sm:$0xff]
    %v683 = vld [vmem:[#allocation8 + $0x628] sm:$0xff]
    %v684 = vld [vmem:[#allocation8 + $0x630] sm:$0xff]
    %v685 = vld [vmem:[#allocation8 + $0x638] sm:$0xff]
    %v686 = vld [vmem:[#allocation8 + $0x640] sm:$0xff]
    %v687 = vld [vmem:[#allocation8 + $0x648] sm:$0xff]
    %v688 = vld [vmem:[#allocation8 + $0x650] sm:$0xff]
    %v689 = vld [vmem:[#allocation8 + $0x658] sm:$0xff]
    %v690 = vld [vmem:[#allocation8 + $0x660] sm:$0xff]
    %v691 = vld [vmem:[#allocation8 + $0x668] sm:$0xff]
    %v692 = vld [vmem:[#allocation8 + $0x670] sm:$0xff]
    %v693 = vld [vmem:[#allocation8 + $0x678] sm:$0xff]
    %v694 = vld [vmem:[#allocation8 + $0x680] sm:$0xff]
    %v695 = vld [vmem:[#allocation8 + $0x688] sm:$0xff]
    %v696 = vld [vmem:[#allocation8 + $0x690] sm:$0xff]
    %v697 = vld [vmem:[#allocation8 + $0x698] sm:$0xff]
    %v698 = vld [vmem:[#allocation8 + $0x6a0] sm:$0xff]
    %v699 = vld [vmem:[#allocation8 + $0x6a8] sm:$0xff]
    %v700 = vld [vmem:[#allocation8 + $0x6b0] sm:$0xff]
    %v701 = vld [vmem:[#allocation8 + $0x6b8] sm:$0xff]
    %v702 = vld [vmem:[#allocation8 + $0x6c0] sm:$0xff]
    %v703 = vld [vmem:[#allocation8 + $0x6c8] sm:$0xff]
    %v704 = vld [vmem:[#allocation8 + $0x6d0] sm:$0xff]
    %v705 = vld [vmem:[#allocation8 + $0x6d8] sm:$0xff]
    %v706 = vld [vmem:[#allocation8 + $0x6e0] sm:$0xff]
    %v707 = vld [vmem:[#allocation8 + $0x6e8] sm:$0xff]
    %v708 = vld [vmem:[#allocation8 + $0x6f0] sm:$0xff]
    %v709 = vld [vmem:[#allocation8 + $0x6f8] sm:$0xff]
    %v710 = vld [vmem:[#allocation8 + $0x700] sm:$0xff]
    %v711 = vld [vmem:[#allocation8 + $0x708] sm:$0xff]
    %v712 = vld [vmem:[#allocation8 + $0x710] sm:$0xff]
    %v713 = vld [vmem:[#allocation8 + $0x718] sm:$0xff]
    %v714 = vld [vmem:[#allocation8 + $0x720] sm:$0xff]
    %v715 = vld [vmem:[#allocation8 + $0x728] sm:$0xff]
    %v716 = vld [vmem:[#allocation8 + $0x730] sm:$0xff]
    %v717 = vld [vmem:[#allocation8 + $0x738] sm:$0xff]
    %v718 = vld [vmem:[#allocation8 + $0x740] sm:$0xff]
    %v719 = vld [vmem:[#allocation8 + $0x748] sm:$0xff]
    %v720 = vld [vmem:[#allocation8 + $0x750] sm:$0xff]
    %v721 = vld [vmem:[#allocation8 + $0x758] sm:$0xff]
    %v722 = vld [vmem:[#allocation8 + $0x760] sm:$0xff]
    %v723 = vld [vmem:[#allocation8 + $0x768] sm:$0xff]
    %v724 = vld [vmem:[#allocation8 + $0x770] sm:$0xff]
    %v725 = vld [vmem:[#allocation8 + $0x778] sm:$0xff]
    %v726 = vld [vmem:[#allocation8 + $0x780] sm:$0xff]
    %v727 = vld [vmem:[#allocation8 + $0x788] sm:$0xff]
    %v728 = vld [vmem:[#allocation8 + $0x790] sm:$0xff]
    %v729 = vld [vmem:[#allocation8 + $0x798] sm:$0xff]
    %v730 = vld [vmem:[#allocation8 + $0x7a0] sm:$0xff]
    %v731 = vld [vmem:[#allocation8 + $0x7a8] sm:$0xff]
    %v732 = vld [vmem:[#allocation8 + $0x7b0] sm:$0xff]
    %v733 = vld [vmem:[#allocation8 + $0x7b8] sm:$0xff]
    %v734 = vld [vmem:[#allocation8 + $0x7c0] sm:$0xff]
    %v735 = vld [vmem:[#allocation8 + $0x7c8] sm:$0xff]
    %v736 = vld [vmem:[#allocation8 + $0x7d0] sm:$0xff]
    %v737 = vld [vmem:[#allocation8 + $0x7d8] sm:$0xff]
    %v738 = vld [vmem:[#allocation8 + $0x7e0] sm:$0xff]
    %v739 = vld [vmem:[#allocation8 + $0x7e8] sm:$0xff]
    %v740 = vld [vmem:[#allocation8 + $0x7f0] sm:$0xff]
    %v741 = vld [vmem:[#allocation8 + $0x7f8] sm:$0xff]
    %v742 = vld [vmem:[#allocation8 + $0x800] sm:$0xff]
    %v743 = vld [vmem:[#allocation8 + $0x808] sm:$0xff]
    %v744 = vld [vmem:[#allocation8 + $0x810] sm:$0xff]
    %v745 = vld [vmem:[#allocation8 + $0x818] sm:$0xff]
    %v746 = vld [vmem:[#allocation8 + $0x820] sm:$0xff]
    %v747 = vld [vmem:[#allocation8 + $0x828] sm:$0xff]
    %v748 = vld [vmem:[#allocation8 + $0x830] sm:$0xff]
    %v749 = vld [vmem:[#allocation8 + $0x838] sm:$0xff]
    %v750 = vld [vmem:[#allocation8 + $0x840] sm:$0xff]
    %v751 = vld [vmem:[#allocation8 + $0x848] sm:$0xff]
    %v752 = vld [vmem:[#allocation8 + $0x850] sm:$0xff]
    %v753 = vld [vmem:[#allocation8 + $0x858] sm:$0xff]
    %v754 = vld [vmem:[#allocation8 + $0x860] sm:$0xff]
    %v755 = vld [vmem:[#allocation8 + $0x868] sm:$0xff]
    %v756 = vld [vmem:[#allocation8 + $0x870] sm:$0xff]
    %v757 = vld [vmem:[#allocation8 + $0x878] sm:$0xff]
    %v758 = vld [vmem:[#allocation8 + $0x880] sm:$0xff]
    %v759 = vld [vmem:[#allocation8 + $0x888] sm:$0xff]
    %v760 = vld [vmem:[#allocation8 + $0x890] sm:$0xff]
    %v761 = vld [vmem:[#allocation8 + $0x898] sm:$0xff]
    %v762 = vld [vmem:[#allocation8 + $0x8a0] sm:$0xff]
    %v763 = vld [vmem:[#allocation8 + $0x8a8] sm:$0xff]
    %v764 = vld [vmem:[#allocation8 + $0x8b0] sm:$0xff]
    %v765 = vld [vmem:[#allocation8 + $0x8b8] sm:$0xff]
    %v766 = vld [vmem:[#allocation8 + $0x8c0] sm:$0xff]
    %v767 = vld [vmem:[#allocation8 + $0x8c8] sm:$0xff]
    %v768 = vld [vmem:[#allocation8 + $0x8d0] sm:$0xff]
    %v769 = vld [vmem:[#allocation8 + $0x8d8] sm:$0xff]
    %v770 = vld [vmem:[#allocation8 + $0x8e0] sm:$0xff]
    %v771 = vld [vmem:[#allocation8 + $0x8e8] sm:$0xff]
    %v772 = vld [vmem:[#allocation8 + $0x8f0] sm:$0xff]
    %v773 = vld [vmem:[#allocation8 + $0x8f8] sm:$0xff]
    %v774 = vld [vmem:[#allocation8 + $0x900] sm:$0xff]
    %v775 = vld [vmem:[#allocation8 + $0x908] sm:$0xff]
    %v776 = vld [vmem:[#allocation8 + $0x910] sm:$0xff]
    %v777 = vld [vmem:[#allocation8 + $0x918] sm:$0xff]
    %v778 = vld [vmem:[#allocation8 + $0x920] sm:$0xff]
    %v779 = vld [vmem:[#allocation8 + $0x928] sm:$0xff]
    %v780 = vld [vmem:[#allocation8 + $0x930] sm:$0xff]
    %v781 = vld [vmem:[#allocation8 + $0x938] sm:$0xff]
    %v782 = vld [vmem:[#allocation8 + $0x940] sm:$0xff]
    %v783 = vld [vmem:[#allocation8 + $0x948] sm:$0xff]
    %v784 = vld [vmem:[#allocation8 + $0x950] sm:$0xff]
    %v785 = vld [vmem:[#allocation8 + $0x958] sm:$0xff]
    %v786 = vld [vmem:[#allocation8 + $0x960] sm:$0xff]
    %v787 = vld [vmem:[#allocation8 + $0x968] sm:$0xff]
    %v788 = vld [vmem:[#allocation8 + $0x970] sm:$0xff]
    %v789 = vld [vmem:[#allocation8 + $0x978] sm:$0xff]
    %v790 = vld [vmem:[#allocation8 + $0x980] sm:$0xff]
    %v791 = vld [vmem:[#allocation8 + $0x988] sm:$0xff]
    %v792 = vld [vmem:[#allocation8 + $0x990] sm:$0xff]
    %v793 = vld [vmem:[#allocation8 + $0x998] sm:$0xff]
    %v794 = vld [vmem:[#allocation8 + $0x9a0] sm:$0xff]
    %v795 = vld [vmem:[#allocation8 + $0x9a8] sm:$0xff]
    %v796 = vld [vmem:[#allocation8 + $0x9b0] sm:$0xff]
    %v797 = vld [vmem:[#allocation8 + $0x9b8] sm:$0xff]
    %v798 = vld [vmem:[#allocation8 + $0x9c0] sm:$0xff]
    %v799 = vld [vmem:[#allocation8 + $0x9c8] sm:$0xff]
    %v800 = vld [vmem:[#allocation8 + $0x9d0] sm:$0xff]
    %v801 = vld [vmem:[#allocation8 + $0x9d8] sm:$0xff]
    %v802 = vld [vmem:[#allocation8 + $0x9e0] sm:$0xff]
    %v803 = vld [vmem:[#allocation8 + $0x9e8] sm:$0xff]
    %v804 = vld [vmem:[#allocation8 + $0x9f0] sm:$0xff]
    %v805 = vld [vmem:[#allocation8 + $0x9f8] sm:$0xff]
    %v806 = vld [vmem:[#allocation8 + $0xa00] sm:$0xff]
    %v807 = vld [vmem:[#allocation8 + $0xa08] sm:$0xff]
    %v808 = vld [vmem:[#allocation8 + $0xa10] sm:$0xff]
    %v809 = vld [vmem:[#allocation8 + $0xa18] sm:$0xff]
    %v810 = vld [vmem:[#allocation8 + $0xa20] sm:$0xff]
    %v811 = vld [vmem:[#allocation8 + $0xa28] sm:$0xff]
    %v812 = vld [vmem:[#allocation8 + $0xa30] sm:$0xff]
    %v813 = vld [vmem:[#allocation8 + $0xa38] sm:$0xff]
    %v814 = vld [vmem:[#allocation8 + $0xa40] sm:$0xff]
    %v815 = vld [vmem:[#allocation8 + $0xa48] sm:$0xff]
    %v816 = vld [vmem:[#allocation8 + $0xa50] sm:$0xff]
    %v817 = vld [vmem:[#allocation8 + $0xa58] sm:$0xff]
    %v818 = vld [vmem:[#allocation8 + $0xa60] sm:$0xff]
    %v819 = vld [vmem:[#allocation8 + $0xa68] sm:$0xff]
    %v820 = vld [vmem:[#allocation8 + $0xa70] sm:$0xff]
    %v821 = vld [vmem:[#allocation8 + $0xa78] sm:$0xff]
    %v822 = vld [vmem:[#allocation8 + $0xa80] sm:$0xff]
    %v823 = vld [vmem:[#allocation8 + $0xa88] sm:$0xff]
    %v824 = vld [vmem:[#allocation8 + $0xa90] sm:$0xff]
    %v825 = vld [vmem:[#allocation8 + $0xa98] sm:$0xff]
    %v826 = vld [vmem:[#allocation8 + $0xaa0] sm:$0xff]
    %v827 = vld [vmem:[#allocation8 + $0xaa8] sm:$0xff]
    %v828 = vld [vmem:[#allocation8 + $0xab0] sm:$0xff]
    %v829 = vld [vmem:[#allocation8 + $0xab8] sm:$0xff]
    %v830 = vld [vmem:[#allocation8 + $0xac0] sm:$0xff]
    %v831 = vld [vmem:[#allocation8 + $0xac8] sm:$0xff]
    %v832 = vld [vmem:[#allocation8 + $0xad0] sm:$0xff]
    %v833 = vld [vmem:[#allocation8 + $0xad8] sm:$0xff]
    %v834 = vld [vmem:[#allocation8 + $0xae0] sm:$0xff]
    %v835 = vld [vmem:[#allocation8 + $0xae8] sm:$0xff]
    %v836 = vld [vmem:[#allocation8 + $0xaf0] sm:$0xff]
    %v837 = vld [vmem:[#allocation8 + $0xaf8] sm:$0xff]
    %v838 = vld [vmem:[#allocation8 + $0xb00] sm:$0xff]
    %v839 = vld [vmem:[#allocation8 + $0xb08] sm:$0xff]
    %v840 = vld [vmem:[#allocation8 + $0xb10] sm:$0xff]
    %v841 = vld [vmem:[#allocation8 + $0xb18] sm:$0xff]
    %v842 = vld [vmem:[#allocation8 + $0xb20] sm:$0xff]
    %v843 = vld [vmem:[#allocation8 + $0xb28] sm:$0xff]
    %v844 = vld [vmem:[#allocation8 + $0xb30] sm:$0xff]
    %v845 = vld [vmem:[#allocation8 + $0xb38] sm:$0xff]
    %v846 = vld [vmem:[#allocation8 + $0xb40] sm:$0xff]
    %v847 = vld [vmem:[#allocation8 + $0xb48] sm:$0xff]
    %v848 = vld [vmem:[#allocation8 + $0xb50] sm:$0xff]
    %v849 = vld [vmem:[#allocation8 + $0xb58] sm:$0xff]
    %v850 = vld [vmem:[#allocation8 + $0xb60] sm:$0xff]
    %v851 = vld [vmem:[#allocation8 + $0xb68] sm:$0xff]
    %v852 = vld [vmem:[#allocation8 + $0xb70] sm:$0xff]
    %v853 = vld [vmem:[#allocation8 + $0xb78] sm:$0xff]
    %v854 = vld [vmem:[#allocation8 + $0xb80] sm:$0xff]
    %v855 = vld [vmem:[#allocation8 + $0xb88] sm:$0xff]
    %v856 = vld [vmem:[#allocation8 + $0xb90] sm:$0xff]
    %v857 = vld [vmem:[#allocation8 + $0xb98] sm:$0xff]
    %v858 = vld [vmem:[#allocation8 + $0xba0] sm:$0xff]
    %v859 = vld [vmem:[#allocation8 + $0xba8] sm:$0xff]
    %v860 = vld [vmem:[#allocation8 + $0xbb0] sm:$0xff]
    %v861 = vld [vmem:[#allocation8 + $0xbb8] sm:$0xff]
    %v862 = vld [vmem:[#allocation8 + $0xbc0] sm:$0xff]
    %v863 = vld [vmem:[#allocation8 + $0xbc8] sm:$0xff]
    %v864 = vld [vmem:[#allocation8 + $0xbd0] sm:$0xff]
    %v865 = vld [vmem:[#allocation8 + $0xbd8] sm:$0xff]
    %v866 = vld [vmem:[#allocation8 + $0xbe0] sm:$0xff]
    %v867 = vld [vmem:[#allocation8 + $0xbe8] sm:$0xff]
    %v868 = vld [vmem:[#allocation8 + $0xbf0] sm:$0xff]
    %v869 = vld [vmem:[#allocation8 + $0xbf8] sm:$0xff]
    %v870 = vld [vmem:[#allocation8 + $0xc00] sm:$0xff]
    %v871 = vld [vmem:[#allocation8 + $0xc08] sm:$0xff]
    %v872 = vld [vmem:[#allocation8 + $0xc10] sm:$0xff]
    %v873 = vld [vmem:[#allocation8 + $0xc18] sm:$0xff]
    %v874 = vld [vmem:[#allocation8 + $0xc20] sm:$0xff]
    %v875 = vld [vmem:[#allocation8 + $0xc28] sm:$0xff]
    %v876 = vld [vmem:[#allocation8 + $0xc30] sm:$0xff]
    %v877 = vld [vmem:[#allocation8 + $0xc38] sm:$0xff]
    %v878 = vld [vmem:[#allocation8 + $0xc40] sm:$0xff]
    %v879 = vld [vmem:[#allocation8 + $0xc48] sm:$0xff]
    %v880 = vld [vmem:[#allocation8 + $0xc50] sm:$0xff]
    %v881 = vld [vmem:[#allocation8 + $0xc58] sm:$0xff]
    %v882 = vld [vmem:[#allocation8 + $0xc60] sm:$0xff]
    %v883 = vld [vmem:[#allocation8 + $0xc68] sm:$0xff]
    %v884 = vld [vmem:[#allocation8 + $0xc70] sm:$0xff]
    %v885 = vld [vmem:[#allocation8 + $0xc78] sm:$0xff]
    %v886 = vld [vmem:[#allocation8 + $0xc80] sm:$0xff]
    %v887 = vld [vmem:[#allocation8 + $0xc88] sm:$0xff]
    %v888 = vld [vmem:[#allocation8 + $0xc90] sm:$0xff]
    %v889 = vld [vmem:[#allocation8 + $0xc98] sm:$0xff]
    %v890 = vld [vmem:[#allocation8 + $0xca0] sm:$0xff]
    %v891 = vld [vmem:[#allocation8 + $0xca8] sm:$0xff]
    %v892 = vld [vmem:[#allocation8 + $0xcb0] sm:$0xff]
    %v893 = vld [vmem:[#allocation8 + $0xcb8] sm:$0xff]
    %v894 = vld [vmem:[#allocation8 + $0xcc0] sm:$0xff]
    %v895 = vld [vmem:[#allocation8 + $0xcc8] sm:$0xff]
    %v896 = vld [vmem:[#allocation8 + $0xcd0] sm:$0xff]
    %v897 = vld [vmem:[#allocation8 + $0xcd8] sm:$0xff]
    %v898 = vld [vmem:[#allocation8 + $0xce0] sm:$0xff]
    %v899 = vld [vmem:[#allocation8 + $0xce8] sm:$0xff]
    %v900 = vld [vmem:[#allocation8 + $0xcf0] sm:$0xff]
    %v901 = vld [vmem:[#allocation8 + $0xcf8] sm:$0xff]
    %v902 = vld [vmem:[#allocation8 + $0xd00] sm:$0xff]
    %v903 = vld [vmem:[#allocation8 + $0xd08] sm:$0xff]
    %v904 = vld [vmem:[#allocation8 + $0xd10] sm:$0xff]
    %v905 = vld [vmem:[#allocation8 + $0xd18] sm:$0xff]
    %v906 = vld [vmem:[#allocation8 + $0xd20] sm:$0xff]
    %v907 = vld [vmem:[#allocation8 + $0xd28] sm:$0xff]
    %v908 = vld [vmem:[#allocation8 + $0xd30] sm:$0xff]
    %v909 = vld [vmem:[#allocation8 + $0xd38] sm:$0xff]
    %v910 = vld [vmem:[#allocation8 + $0xd40] sm:$0xff]
    %v911 = vld [vmem:[#allocation8 + $0xd48] sm:$0xff]
    %v912 = vld [vmem:[#allocation8 + $0xd50] sm:$0xff]
    %v913 = vld [vmem:[#allocation8 + $0xd58] sm:$0xff]
    %v914 = vld [vmem:[#allocation8 + $0xd60] sm:$0xff]
    %v915 = vld [vmem:[#allocation8 + $0xd68] sm:$0xff]
    %v916 = vld [vmem:[#allocation8 + $0xd70] sm:$0xff]
    %v917 = vld [vmem:[#allocation8 + $0xd78] sm:$0xff]
    %v918 = vld [vmem:[#allocation8 + $0xd80] sm:$0xff]
    %v919 = vld [vmem:[#allocation8 + $0xd88] sm:$0xff]
    %v920 = vld [vmem:[#allocation8 + $0xd90] sm:$0xff]
    %v921 = vld [vmem:[#allocation8 + $0xd98] sm:$0xff]
    %v922 = vld [vmem:[#allocation8 + $0xda0] sm:$0xff]
    %v923 = vld [vmem:[#allocation8 + $0xda8] sm:$0xff]
    %v924 = vld [vmem:[#allocation8 + $0xdb0] sm:$0xff]
    %v925 = vld [vmem:[#allocation8 + $0xdb8] sm:$0xff]
    %v926 = vld [vmem:[#allocation8 + $0xdc0] sm:$0xff]
    %v927 = vld [vmem:[#allocation8 + $0xdc8] sm:$0xff]
    %v928 = vld [vmem:[#allocation8 + $0xdd0] sm:$0xff]
    %v929 = vld [vmem:[#allocation8 + $0xdd8] sm:$0xff]
    %v930 = vld [vmem:[#allocation8 + $0xde0] sm:$0xff]
    %v931 = vld [vmem:[#allocation8 + $0xde8] sm:$0xff]
    %v932 = vld [vmem:[#allocation8 + $0xdf0] sm:$0xff]
    %v933 = vld [vmem:[#allocation8 + $0xdf8] sm:$0xff]
    %v934 = vld [vmem:[#allocation8 + $0xe00] sm:$0xff]
    %v935 = vld [vmem:[#allocation8 + $0xe08] sm:$0xff]
    %v936 = vld [vmem:[#allocation8 + $0xe10] sm:$0xff]
    %v937 = vld [vmem:[#allocation8 + $0xe18] sm:$0xff]
    %v938 = vld [vmem:[#allocation8 + $0xe20] sm:$0xff]
    %v939 = vld [vmem:[#allocation8 + $0xe28] sm:$0xff]
    %v940 = vld [vmem:[#allocation8 + $0xe30] sm:$0xff]
    %v941 = vld [vmem:[#allocation8 + $0xe38] sm:$0xff]
    %v942 = vld [vmem:[#allocation8 + $0xe40] sm:$0xff]
    %v943 = vld [vmem:[#allocation8 + $0xe48] sm:$0xff]
    %v944 = vld [vmem:[#allocation8 + $0xe50] sm:$0xff]
    %v945 = vld [vmem:[#allocation8 + $0xe58] sm:$0xff]
    %v946 = vld [vmem:[#allocation8 + $0xe60] sm:$0xff]
    %v947 = vld [vmem:[#allocation8 + $0xe68] sm:$0xff]
    %v948 = vld [vmem:[#allocation8 + $0xe70] sm:$0xff]
    %v949 = vld [vmem:[#allocation8 + $0xe78] sm:$0xff]
    %v950 = vld [vmem:[#allocation8 + $0xe80] sm:$0xff]
    %v951 = vld [vmem:[#allocation8 + $0xe88] sm:$0xff]
    %v952 = vld [vmem:[#allocation8 + $0xe90] sm:$0xff]
    %v953 = vld [vmem:[#allocation8 + $0xe98] sm:$0xff]
    %v954 = vld [vmem:[#allocation8 + $0xea0] sm:$0xff]
    %v955 = vld [vmem:[#allocation8 + $0xea8] sm:$0xff]
    %v956 = vld [vmem:[#allocation8 + $0xeb0] sm:$0xff]
    %v957 = vld [vmem:[#allocation8 + $0xeb8] sm:$0xff]
    %v958 = vld [vmem:[#allocation8 + $0xec0] sm:$0xff]
    %v959 = vld [vmem:[#allocation8 + $0xec8] sm:$0xff]
    %v960 = vld [vmem:[#allocation8 + $0xed0] sm:$0xff]
    %v961 = vld [vmem:[#allocation8 + $0xed8] sm:$0xff]
    %v962 = vld [vmem:[#allocation8 + $0xee0] sm:$0xff]
    %v963 = vld [vmem:[#allocation8 + $0xee8] sm:$0xff]
    %v964 = vld [vmem:[#allocation8 + $0xef0] sm:$0xff]
    %v965 = vld [vmem:[#allocation8 + $0xef8] sm:$0xff]
    %v966 = vld [vmem:[#allocation8 + $0xf00] sm:$0xff]
    %v967 = vld [vmem:[#allocation8 + $0xf08] sm:$0xff]
    %v968 = vld [vmem:[#allocation8 + $0xf10] sm:$0xff]
    %v969 = vld [vmem:[#allocation8 + $0xf18] sm:$0xff]
    %v970 = vld [vmem:[#allocation8 + $0xf20] sm:$0xff]
    %v971 = vld [vmem:[#allocation8 + $0xf28] sm:$0xff]
    %v972 = vld [vmem:[#allocation8 + $0xf30] sm:$0xff]
    %v973 = vld [vmem:[#allocation8 + $0xf38] sm:$0xff]
    %v974 = vld [vmem:[#allocation8 + $0xf40] sm:$0xff]
    %v975 = vld [vmem:[#allocation8 + $0xf48] sm:$0xff]
    %v976 = vld [vmem:[#allocation8 + $0xf50] sm:$0xff]
    %v977 = vld [vmem:[#allocation8 + $0xf58] sm:$0xff]
    %v978 = vld [vmem:[#allocation8 + $0xf60] sm:$0xff]
    %v979 = vld [vmem:[#allocation8 + $0xf68] sm:$0xff]
    %v980 = vld [vmem:[#allocation8 + $0xf70] sm:$0xff]
    %v981 = vld [vmem:[#allocation8 + $0xf78] sm:$0xff]
    %v982 = vld [vmem:[#allocation8 + $0xf80] sm:$0xff]
    %v983 = vld [vmem:[#allocation8 + $0xf88] sm:$0xff]
    %v984 = vld [vmem:[#allocation8 + $0xf90] sm:$0xff]
    %v985 = vld [vmem:[#allocation8 + $0xf98] sm:$0xff]
    %v986 = vld [vmem:[#allocation8 + $0xfa0] sm:$0xff]
    %v987 = vld [vmem:[#allocation8 + $0xfa8] sm:$0xff]
    %v988 = vld [vmem:[#allocation8 + $0xfb0] sm:$0xff]
    %v989 = vld [vmem:[#allocation8 + $0xfb8] sm:$0xff]
    %v990 = vld [vmem:[#allocation8 + $0xfc0] sm:$0xff]
    %v991 = vld [vmem:[#allocation8 + $0xfc8] sm:$0xff]
    %v992 = vld [vmem:[#allocation8 + $0xfd0] sm:$0xff]
    %v993 = vld [vmem:[#allocation8 + $0xfd8] sm:$0xff]
    %v994 = vld [vmem:[#allocation8 + $0xfe0] sm:$0xff]
    %v995 = vld [vmem:[#allocation8 + $0xfe8] sm:$0xff]
    %v996 = vld [vmem:[#allocation8 + $0xff0] sm:$0xff]
    %v997 = vld [vmem:[#allocation8 + $0xff8] sm:$0xff]
    %v998 = vld [vmem:[#allocation8 + $0x1000] sm:$0xff]
    %v999 = vld [vmem:[#allocation8 + $0x1008] sm:$0xff]
    %v1000 = vld [vmem:[#allocation8 + $0x1010] sm:$0xff]
    %v1001 = vld [vmem:[#allocation8 + $0x1018] sm:$0xff]
    %v1002 = vld [vmem:[#allocation8 + $0x1020] sm:$0xff]
    %v1003 = vld [vmem:[#allocation8 + $0x1028] sm:$0xff]
    %v1004 = vld [vmem:[#allocation8 + $0x1030] sm:$0xff]
    %v1005 = vld [vmem:[#allocation8 + $0x1038] sm:$0xff]
    %v1006 = vld [vmem:[#allocation8 + $0x1040] sm:$0xff]
    %v1007 = vld [vmem:[#allocation8 + $0x1048] sm:$0xff]
    %v1008 = vld [vmem:[#allocation8 + $0x1050] sm:$0xff]
    %v1009 = vld [vmem:[#allocation8 + $0x1058] sm:$0xff]
    %v1010 = vld [vmem:[#allocation8 + $0x1060] sm:$0xff]
    %v1011 = vld [vmem:[#allocation8 + $0x1068] sm:$0xff]
    %v1012 = vld [vmem:[#allocation8 + $0x1070] sm:$0xff]
    %v1013 = vld [vmem:[#allocation8 + $0x1078] sm:$0xff]
    %v1014 = vld [vmem:[#allocation8 + $0x1080] sm:$0xff]
    %v1015 = vld [vmem:[#allocation8 + $0x1088] sm:$0xff]
    %v1016 = vld [vmem:[#allocation8 + $0x1090] sm:$0xff]
    %v1017 = vld [vmem:[#allocation8 + $0x1098] sm:$0xff]
    %v1018 = vld [vmem:[#allocation8 + $0x10a0] sm:$0xff]
    %v1019 = vld [vmem:[#allocation8 + $0x10a8] sm:$0xff]
    %v1020 = vld [vmem:[#allocation8 + $0x10b0] sm:$0xff]
    %v1021 = vld [vmem:[#allocation8 + $0x10b8] sm:$0xff]
    %v1022 = vld [vmem:[#allocation8 + $0x10c0] sm:$0xff]
    %v1023 = vld [vmem:[#allocation8 + $0x10c8] sm:$0xff]
    %v1024 = vld [vmem:[#allocation8 + $0x10d0] sm:$0xff]
    %v1025 = vld [vmem:[#allocation8 + $0x10d8] sm:$0xff]
    %v1026 = vld [vmem:[#allocation8 + $0x10e0] sm:$0xff]
    %v1027 = vld [vmem:[#allocation8 + $0x10e8] sm:$0xff]
    %v1028 = vld [vmem:[#allocation8 + $0x10f0] sm:$0xff]
    %v1029 = vld [vmem:[#allocation8 + $0x10f8] sm:$0xff]
    %v1030 = vld [vmem:[#allocation8 + $0x1100] sm:$0xff]
    %v1031 = vld [vmem:[#allocation8 + $0x1108] sm:$0xff]
    %v1032 = vld [vmem:[#allocation8 + $0x1110] sm:$0xff]
    %v1033 = vld [vmem:[#allocation8 + $0x1118] sm:$0xff]
    %v1034 = vld [vmem:[#allocation8 + $0x1120] sm:$0xff]
    %v1035 = vld [vmem:[#allocation8 + $0x1128] sm:$0xff]
    %v1036 = vld [vmem:[#allocation8 + $0x1130] sm:$0xff]
    %v1037 = vld [vmem:[#allocation8 + $0x1138] sm:$0xff]
    %v1038 = vld [vmem:[#allocation8 + $0x1140] sm:$0xff]
    %v1039 = vld [vmem:[#allocation8 + $0x1148] sm:$0xff]
    %v1040 = vld [vmem:[#allocation8 + $0x1150] sm:$0xff]
    %v1041 = vld [vmem:[#allocation8 + $0x1158] sm:$0xff]
    %v1042 = vld [vmem:[#allocation8 + $0x1160] sm:$0xff]
    %v1043 = vld [vmem:[#allocation8 + $0x1168] sm:$0xff]
    %v1044 = vld [vmem:[#allocation8 + $0x1170] sm:$0xff]
    %v1045 = vld [vmem:[#allocation8 + $0x1178] sm:$0xff]
    %v1046 = vld [vmem:[#allocation8 + $0x1180] sm:$0xff]
    %v1047 = vld [vmem:[#allocation8 + $0x1188] sm:$0xff]
    %v1048 = vld [vmem:[#allocation8 + $0x1190] sm:$0xff]
    %v1049 = vld [vmem:[#allocation8 + $0x1198] sm:$0xff]
    %v1050 = vld [vmem:[#allocation8 + $0x11a0] sm:$0xff]
    %v1051 = vld [vmem:[#allocation8 + $0x11a8] sm:$0xff]
    %v1052 = vld [vmem:[#allocation8 + $0x11b0] sm:$0xff]
    %v1053 = vld [vmem:[#allocation8 + $0x11b8] sm:$0xff]
    %v1054 = vld [vmem:[#allocation8 + $0x11c0] sm:$0xff]
    %v1055 = vld [vmem:[#allocation8 + $0x11c8] sm:$0xff]
    %v1056 = vld [vmem:[#allocation8 + $0x11d0] sm:$0xff]
    %v1057 = vld [vmem:[#allocation8 + $0x11d8] sm:$0xff]
    %v1058 = vld [vmem:[#allocation8 + $0x11e0] sm:$0xff]
    %v1059 = vld [vmem:[#allocation8 + $0x11e8] sm:$0xff]
    %v1060 = vld [vmem:[#allocation8 + $0x11f0] sm:$0xff]
    %v1061 = vld [vmem:[#allocation8 + $0x11f8] sm:$0xff]
    %v1062 = vld [vmem:[#allocation10] sm:$0x3f]
    %v1064 = vlaneseq
    %v1065 = vshrl.u32 %v1064, 7
    %v1066 = vsub.s32 0, %v1065
    %v1067 = vrot.slane %v1062, %v1066
    %v1068 = vlaneseq
    %v1069 = vshrl.u32 %v1068, 7
    %v1070 = vsub.s32 1, %v1069
    %v1071 = vrot.slane %v1062, %v1070
    %v1072 = vlaneseq
    %v1073 = vshrl.u32 %v1072, 7
    %v1074 = vsub.s32 2, %v1073
    %v1075 = vrot.slane %v1062, %v1074
    %v1076 = vlaneseq
    %v1077 = vshrl.u32 %v1076, 7
    %v1078 = vsub.s32 3, %v1077
    %v1079 = vrot.slane %v1062, %v1078
    %v1080 = vlaneseq
    %v1081 = vshrl.u32 %v1080, 7
    %v1082 = vsub.s32 4, %v1081
    %v1083 = vrot.slane %v1062, %v1082
    %v1084 = vlaneseq
    %v1085 = vshrl.u32 %v1084, 7
    %v1086 = vsub.s32 5, %v1085
    %v1087 = vrot.slane %v1062, %v1086
    %1094 = vmatprep.subr.mxu0 %v487
    %1095 = vmatpush1.msra.mxu0 %v486
    %1096 = vmatprep.subr.mxu0 %v493
    %1097 = vmatpush1.msra.mxu0 %v492
    %1098 = vmatprep.subr.mxu0 %v499
    %1099 = vmatpush1.msra.mxu0 %v498
    %1100 = vmatprep.subr.mxu0 %v505
    %1101 = vmatpush1.msra.mxu0 %v504
    %1102 = vmatprep.subr.mxu0 %v511
    %1103 = vmatpush1.msra.mxu0 %v510
    %1104 = vmatprep.subr.mxu0 %v517
    %1105 = vmatpush1.msra.mxu0 %v516
    %1106 = vmatprep.subr.mxu0 %v523
    %1107 = vmatpush1.msra.mxu0 %v522
    %1108 = vmatprep.subr.mxu0 %v529
    %1109 = vmatpush1.msra.mxu0 %v528
    %1110 = vmatprep.subr.mxu0 %v535
    %1111 = vmatpush1.msra.mxu0 %v534
    %1112 = vmatprep.subr.mxu0 %v541
    %1113 = vmatpush1.msra.mxu0 %v540
    %1114 = vmatprep.subr.mxu0 %v547
    %1115 = vmatpush1.msra.mxu0 %v546
    %1116 = vmatprep.subr.mxu0 %v553
    %1117 = vmatpush1.msra.mxu0 %v552
    %1118 = vmatprep.subr.mxu0 %v559
    %1119 = vmatpush1.msra.mxu0 %v558
    %1120 = vmatprep.subr.mxu0 %v565
    %1121 = vmatpush1.msra.mxu0 %v564
    %1122 = vmatprep.subr.mxu0 %v571
    %1123 = vmatpush1.msra.mxu0 %v570
    %1124 = vmatprep.subr.mxu0 %v577
    %1125 = vmatpush1.msra.mxu0 %v576
    %1126 = vmatprep.subr.mxu0 %v583
    %1127 = vmatpush1.msra.mxu0 %v582
    %1128 = vmatprep.subr.mxu0 %v589
    %1129 = vmatpush1.msra.mxu0 %v588
    %1130 = vmatprep.subr.mxu0 %v595
    %1131 = vmatpush1.msra.mxu0 %v594
    %1132 = vmatprep.subr.mxu0 %v601
    %1133 = vmatpush1.msra.mxu0 %v600
    %1134 = vmatprep.subr.mxu0 %v607
    %1135 = vmatpush1.msra.mxu0 %v606
    %1136 = vmatprep.subr.mxu0 %v613
    %1137 = vmatpush1.msra.mxu0 %v612
    %1138 = vmatprep.subr.mxu0 %v619
    %1139 = vmatpush1.msra.mxu0 %v618
    %1140 = vmatprep.subr.mxu0 %v625
    %1141 = vmatpush1.msra.mxu0 %v624
    %1142 = vmatprep.subr.mxu0 %v631
    %1143 = vmatpush1.msra.mxu0 %v630
    %1144 = vmatprep.subr.mxu0 %v637
    %1145 = vmatpush1.msra.mxu0 %v636
    %1146 = vmatprep.subr.mxu0 %v643
    %1147 = vmatpush1.msra.mxu0 %v642
    %1148 = vmatprep.subr.mxu0 %v649
    %1149 = vmatpush1.msra.mxu0 %v648
    %1150 = vmatprep.subr.mxu0 %v655
    %1151 = vmatpush1.msra.mxu0 %v654
    %1152 = vmatprep.subr.mxu0 %v661
    %1153 = vmatpush1.msra.mxu0 %v660
    %1154 = vmatprep.subr.mxu0 %v667
    %1155 = vmatpush1.msra.mxu0 %v666
    %1156 = vmatprep.subr.mxu0 %v673
    %1157 = vmatpush1.msra.mxu0 %v672
    %1158 = vmatprep.mubr.f32.mxu0 %v481
    %1159 = vmatmul.mubr.f32.gmra.mrb[0].mxu0 %v480
    %v1160 = vpop.f32.mrb[0].mxu0
    %v1161 = vadd.f32 %v1067, %v1160
    %v1162 = vpop.f32.mrb[0].mxu0
    %v1163 = vadd.f32 %v1071, %v1162
    %1164 = vdwg.mxu0
    %1165 = vmatprep.subr.mxu0 %v679
    %1166 = vmatpush1.msra.mxu0 %v678
    %1167 = vmatprep.subr.mxu0 %v685
    %1168 = vmatpush1.msra.mxu0 %v684
    %1169 = vmatprep.subr.mxu0 %v691
    %1170 = vmatpush1.msra.mxu0 %v690
    %1171 = vmatprep.subr.mxu0 %v697
    %1172 = vmatpush1.msra.mxu0 %v696
    %1173 = vmatprep.subr.mxu0 %v703
    %1174 = vmatpush1.msra.mxu0 %v702
    %1175 = vmatprep.subr.mxu0 %v709
    %1176 = vmatpush1.msra.mxu0 %v708
    %1177 = vmatprep.subr.mxu0 %v715
    %1178 = vmatpush1.msra.mxu0 %v714
    %1179 = vmatprep.subr.mxu0 %v721
    %1180 = vmatpush1.msra.mxu0 %v720
    %1181 = vmatprep.subr.mxu0 %v727
    %1182 = vmatpush1.msra.mxu0 %v726
    %1183 = vmatprep.subr.mxu0 %v733
    %1184 = vmatpush1.msra.mxu0 %v732
    %1185 = vmatprep.subr.mxu0 %v739
    %1186 = vmatpush1.msra.mxu0 %v738
    %1187 = vmatprep.subr.mxu0 %v745
    %1188 = vmatpush1.msra.mxu0 %v744
    %1189 = vmatprep.subr.mxu0 %v751
    %1190 = vmatpush1.msra.mxu0 %v750
    %1191 = vmatprep.subr.mxu0 %v757
    %1192 = vmatpush1.msra.mxu0 %v756
    %1193 = vmatprep.subr.mxu0 %v763
    %1194 = vmatpush1.msra.mxu0 %v762
    %1195 = vmatprep.subr.mxu0 %v769
    %1196 = vmatpush1.msra.mxu0 %v768
    %1197 = vmatprep.subr.mxu0 %v775
    %1198 = vmatpush1.msra.mxu0 %v774
    %1199 = vmatprep.subr.mxu0 %v781
    %1200 = vmatpush1.msra.mxu0 %v780
    %1201 = vmatprep.subr.mxu0 %v787
    %1202 = vmatpush1.msra.mxu0 %v786
    %1203 = vmatprep.subr.mxu0 %v793
    %1204 = vmatpush1.msra.mxu0 %v792
    %1205 = vmatprep.subr.mxu0 %v799
    %1206 = vmatpush1.msra.mxu0 %v798
    %1207 = vmatprep.subr.mxu0 %v805
    %1208 = vmatpush1.msra.mxu0 %v804
    %1209 = vmatprep.subr.mxu0 %v811
    %1210 = vmatpush1.msra.mxu0 %v810
    %1211 = vmatprep.subr.mxu0 %v817
    %1212 = vmatpush1.msra.mxu0 %v816
    %1213 = vmatprep.subr.mxu0 %v823
    %1214 = vmatpush1.msra.mxu0 %v822
    %1215 = vmatprep.subr.mxu0 %v829
    %1216 = vmatpush1.msra.mxu0 %v828
    %1217 = vmatprep.subr.mxu0 %v835
    %1218 = vmatpush1.msra.mxu0 %v834
    %1219 = vmatprep.subr.mxu0 %v841
    %1220 = vmatpush1.msra.mxu0 %v840
    %1221 = vmatprep.subr.mxu0 %v847
    %1222 = vmatpush1.msra.mxu0 %v846
    %1223 = vmatprep.subr.mxu0 %v853
    %1224 = vmatpush1.msra.mxu0 %v852
    %1225 = vmatprep.subr.mxu0 %v859
    %1226 = vmatpush1.msra.mxu0 %v858
    %1227 = vmatprep.subr.mxu0 %v865
    %1228 = vmatpush1.msra.mxu0 %v864
    %1229 = vmatprep.mubr.f32.mxu0 %v483
    %1230 = vmatmul.mubr.f32.gmra.mrb[0].mxu0 %v482
    %v1231 = vpop.f32.mrb[0].mxu0
    %v1232 = vadd.f32 %v1161, %v1231
    %v1233 = vpop.f32.mrb[0].mxu0
    %v1234 = vadd.f32 %v1163, %v1233
    %1235 = vdwg.mxu0
    %1236 = vmatprep.subr.mxu0 %v871
    %1237 = vmatpush1.msra.mxu0 %v870
    %1238 = vmatprep.subr.mxu0 %v877
    %1239 = vmatpush1.msra.mxu0 %v876
    %1240 = vmatprep.subr.mxu0 %v883
    %1241 = vmatpush1.msra.mxu0 %v882
    %1242 = vmatprep.subr.mxu0 %v889
    %1243 = vmatpush1.msra.mxu0 %v888
    %1244 = vmatprep.subr.mxu0 %v895
    %1245 = vmatpush1.msra.mxu0 %v894
    %1246 = vmatprep.subr.mxu0 %v901
    %1247 = vmatpush1.msra.mxu0 %v900
    %1248 = vmatprep.subr.mxu0 %v907
    %1249 = vmatpush1.msra.mxu0 %v906
    %1250 = vmatprep.subr.mxu0 %v913
    %1251 = vmatpush1.msra.mxu0 %v912
    %1252 = vmatprep.subr.mxu0 %v919
    %1253 = vmatpush1.msra.mxu0 %v918
    %1254 = vmatprep.subr.mxu0 %v925
    %1255 = vmatpush1.msra.mxu0 %v924
    %1256 = vmatprep.subr.mxu0 %v931
    %1257 = vmatpush1.msra.mxu0 %v930
    %1258 = vmatprep.subr.mxu0 %v937
    %1259 = vmatpush1.msra.mxu0 %v936
    %1260 = vmatprep.subr.mxu0 %v943
    %1261 = vmatpush1.msra.mxu0 %v942
    %1262 = vmatprep.subr.mxu0 %v949
    %1263 = vmatpush1.msra.mxu0 %v948
    %1264 = vmatprep.subr.mxu0 %v955
    %1265 = vmatpush1.msra.mxu0 %v954
    %1266 = vmatprep.subr.mxu0 %v961
    %1267 = vmatpush1.msra.mxu0 %v960
    %1268 = vmatprep.subr.mxu0 %v967
    %1269 = vmatpush1.msra.mxu0 %v966
    %1270 = vmatprep.subr.mxu0 %v973
    %1271 = vmatpush1.msra.mxu0 %v972
    %1272 = vmatprep.subr.mxu0 %v979
    %1273 = vmatpush1.msra.mxu0 %v978
    %1274 = vmatprep.subr.mxu0 %v985
    %1275 = vmatpush1.msra.mxu0 %v984
    %1276 = vmatprep.subr.mxu0 %v991
    %1277 = vmatpush1.msra.mxu0 %v990
    %1278 = vmatprep.subr.mxu0 %v997
    %1279 = vmatpush1.msra.mxu0 %v996
    %1280 = vmatprep.subr.mxu0 %v1003
    %1281 = vmatpush1.msra.mxu0 %v1002
    %1282 = vmatprep.subr.mxu0 %v1009
    %1283 = vmatpush1.msra.mxu0 %v1008
    %1284 = vmatprep.subr.mxu0 %v1015
    %1285 = vmatpush1.msra.mxu0 %v1014
    %1286 = vmatprep.subr.mxu0 %v1021
    %1287 = vmatpush1.msra.mxu0 %v1020
    %1288 = vmatprep.subr.mxu0 %v1027
    %1289 = vmatpush1.msra.mxu0 %v1026
    %1290 = vmatprep.subr.mxu0 %v1033
    %1291 = vmatpush1.msra.mxu0 %v1032
    %1292 = vmatprep.subr.mxu0 %v1039
    %1293 = vmatpush1.msra.mxu0 %v1038
    %1294 = vmatprep.subr.mxu0 %v1045
    %1295 = vmatpush1.msra.mxu0 %v1044
    %1296 = vmatprep.subr.mxu0 %v1051
    %1297 = vmatpush1.msra.mxu0 %v1050
    %1298 = vmatprep.subr.mxu0 %v1057
    %1299 = vmatpush1.msra.mxu0 %v1056
    %1300 = vmatprep.mubr.f32.mxu0 %v485
    %1301 = vmatmul.mubr.f32.gmra.mrb[0].mxu0 %v484
    %v1302 = vpop.f32.mrb[0].mxu0
    %v1303 = vadd.f32 %v1232, %v1302
    %v1304 = vpop.f32.mrb[0].mxu0
    %v1305 = vadd.f32 %v1234, %v1304
    %1306 = vdwg.mxu0
    %1307 = vmatprep.subr.mxu0 %v489
    %1308 = vmatpush1.msra.mxu0 %v488
    %1309 = vmatprep.subr.mxu0 %v495
    %1310 = vmatpush1.msra.mxu0 %v494
    %1311 = vmatprep.subr.mxu0 %v501
    %1312 = vmatpush1.msra.mxu0 %v500
    %1313 = vmatprep.subr.mxu0 %v507
    %1314 = vmatpush1.msra.mxu0 %v506
    %1315 = vmatprep.subr.mxu0 %v513
    %1316 = vmatpush1.msra.mxu0 %v512
    %1317 = vmatprep.subr.mxu0 %v519
    %1318 = vmatpush1.msra.mxu0 %v518
    %1319 = vmatprep.subr.mxu0 %v525
    %1320 = vmatpush1.msra.mxu0 %v524
    %1321 = vmatprep.subr.mxu0 %v531
    %1322 = vmatpush1.msra.mxu0 %v530
    %1323 = vmatprep.subr.mxu0 %v537
    %1324 = vmatpush1.msra.mxu0 %v536
    %1325 = vmatprep.subr.mxu0 %v543
    %1326 = vmatpush1.msra.mxu0 %v542
    %1327 = vmatprep.subr.mxu0 %v549
    %1328 = vmatpush1.msra.mxu0 %v548
    %1329 = vmatprep.subr.mxu0 %v555
    %1330 = vmatpush1.msra.mxu0 %v554
    %1331 = vmatprep.subr.mxu0 %v561
    %1332 = vmatpush1.msra.mxu0 %v560
    %1333 = vmatprep.subr.mxu0 %v567
    %1334 = vmatpush1.msra.mxu0 %v566
    %1335 = vmatprep.subr.mxu0 %v573
    %1336 = vmatpush1.msra.mxu0 %v572
    %1337 = vmatprep.subr.mxu0 %v579
    %1338 = vmatpush1.msra.mxu0 %v578
    %1339 = vmatprep.subr.mxu0 %v585
    %1340 = vmatpush1.msra.mxu0 %v584
    %1341 = vmatprep.subr.mxu0 %v591
    %1342 = vmatpush1.msra.mxu0 %v590
    %1343 = vmatprep.subr.mxu0 %v597
    %1344 = vmatpush1.msra.mxu0 %v596
    %1345 = vmatprep.subr.mxu0 %v603
    %1346 = vmatpush1.msra.mxu0 %v602
    %1347 = vmatprep.subr.mxu0 %v609
    %1348 = vmatpush1.msra.mxu0 %v608
    %1349 = vmatprep.subr.mxu0 %v615
    %1350 = vmatpush1.msra.mxu0 %v614
    %1351 = vmatprep.subr.mxu0 %v621
    %1352 = vmatpush1.msra.mxu0 %v620
    %1353 = vmatprep.subr.mxu0 %v627
    %1354 = vmatpush1.msra.mxu0 %v626
    %1355 = vmatprep.subr.mxu0 %v633
    %1356 = vmatpush1.msra.mxu0 %v632
    %1357 = vmatprep.subr.mxu0 %v639
    %1358 = vmatpush1.msra.mxu0 %v638
    %1359 = vmatprep.subr.mxu0 %v645
    %1360 = vmatpush1.msra.mxu0 %v644
    %1361 = vmatprep.subr.mxu0 %v651
    %1362 = vmatpush1.msra.mxu0 %v650
    %1363 = vmatprep.subr.mxu0 %v657
    %1364 = vmatpush1.msra.mxu0 %v656
    %1365 = vmatprep.subr.mxu0 %v663
    %1366 = vmatpush1.msra.mxu0 %v662
    %1367 = vmatprep.subr.mxu0 %v669
    %1368 = vmatpush1.msra.mxu0 %v668
    %1369 = vmatprep.subr.mxu0 %v675
    %1370 = vmatpush1.msra.mxu0 %v674
    %1371 = vmatprep.mubr.f32.mxu0 %v481
    %1372 = vmatmul.mubr.f32.gmra.mrb[0].mxu0 %v480
    %v1373 = vpop.f32.mrb[0].mxu0
    %v1374 = vadd.f32 %v1075, %v1373
    %v1375 = vpop.f32.mrb[0].mxu0
    %v1376 = vadd.f32 %v1079, %v1375
    %1377 = vdwg.mxu0
    %1378 = vmatprep.subr.mxu0 %v681
    %1379 = vmatpush1.msra.mxu0 %v680
    %1380 = vmatprep.subr.mxu0 %v687
    %1381 = vmatpush1.msra.mxu0 %v686
    %1382 = vmatprep.subr.mxu0 %v693
    %1383 = vmatpush1.msra.mxu0 %v692
    %1384 = vmatprep.subr.mxu0 %v699
    %1385 = vmatpush1.msra.mxu0 %v698
    %1386 = vmatprep.subr.mxu0 %v705
    %1387 = vmatpush1.msra.mxu0 %v704
    %1388 = vmatprep.subr.mxu0 %v711
    %1389 = vmatpush1.msra.mxu0 %v710
    %1390 = vmatprep.subr.mxu0 %v717
    %1391 = vmatpush1.msra.mxu0 %v716
    %1392 = vmatprep.subr.mxu0 %v723
    %1393 = vmatpush1.msra.mxu0 %v722
    %1394 = vmatprep.subr.mxu0 %v729
    %1395 = vmatpush1.msra.mxu0 %v728
    %1396 = vmatprep.subr.mxu0 %v735
    %1397 = vmatpush1.msra.mxu0 %v734
    %1398 = vmatprep.subr.mxu0 %v741
    %1399 = vmatpush1.msra.mxu0 %v740
    %1400 = vmatprep.subr.mxu0 %v747
    %1401 = vmatpush1.msra.mxu0 %v746
    %1402 = vmatprep.subr.mxu0 %v753
    %1403 = vmatpush1.msra.mxu0 %v752
    %1404 = vmatprep.subr.mxu0 %v759
    %1405 = vmatpush1.msra.mxu0 %v758
    %1406 = vmatprep.subr.mxu0 %v765
    %1407 = vmatpush1.msra.mxu0 %v764
    %1408 = vmatprep.subr.mxu0 %v771
    %1409 = vmatpush1.msra.mxu0 %v770
    %1410 = vmatprep.subr.mxu0 %v777
    %1411 = vmatpush1.msra.mxu0 %v776
    %1412 = vmatprep.subr.mxu0 %v783
    %1413 = vmatpush1.msra.mxu0 %v782
    %1414 = vmatprep.subr.mxu0 %v789
    %1415 = vmatpush1.msra.mxu0 %v788
    %1416 = vmatprep.subr.mxu0 %v795
    %1417 = vmatpush1.msra.mxu0 %v794
    %1418 = vmatprep.subr.mxu0 %v801
    %1419 = vmatpush1.msra.mxu0 %v800
    %1420 = vmatprep.subr.mxu0 %v807
    %1421 = vmatpush1.msra.mxu0 %v806
    %1422 = vmatprep.subr.mxu0 %v813
    %1423 = vmatpush1.msra.mxu0 %v812
    %1424 = vmatprep.subr.mxu0 %v819
    %1425 = vmatpush1.msra.mxu0 %v818
    %1426 = vmatprep.subr.mxu0 %v825
    %1427 = vmatpush1.msra.mxu0 %v824
    %1428 = vmatprep.subr.mxu0 %v831
    %1429 = vmatpush1.msra.mxu0 %v830
    %1430 = vmatprep.subr.mxu0 %v837
    %1431 = vmatpush1.msra.mxu0 %v836
    %1432 = vmatprep.subr.mxu0 %v843
    %1433 = vmatpush1.msra.mxu0 %v842
    %1434 = vmatprep.subr.mxu0 %v849
    %1435 = vmatpush1.msra.mxu0 %v848
    %1436 = vmatprep.subr.mxu0 %v855
    %1437 = vmatpush1.msra.mxu0 %v854
    %1438 = vmatprep.subr.mxu0 %v861
    %1439 = vmatpush1.msra.mxu0 %v860
    %1440 = vmatprep.subr.mxu0 %v867
    %1441 = vmatpush1.msra.mxu0 %v866
    %1442 = vmatprep.mubr.f32.mxu0 %v483
    %1443 = vmatmul.mubr.f32.gmra.mrb[0].mxu0 %v482
    %v1444 = vpop.f32.mrb[0].mxu0
    %v1445 = vadd.f32 %v1374, %v1444
    %v1446 = vpop.f32.mrb[0].mxu0
    %v1447 = vadd.f32 %v1376, %v1446
    %1448 = vdwg.mxu0
    %1449 = vmatprep.subr.mxu0 %v873
    %1450 = vmatpush1.msra.mxu0 %v872
    %1451 = vmatprep.subr.mxu0 %v879
    %1452 = vmatpush1.msra.mxu0 %v878
    %1453 = vmatprep.subr.mxu0 %v885
    %1454 = vmatpush1.msra.mxu0 %v884
    %1455 = vmatprep.subr.mxu0 %v891
    %1456 = vmatpush1.msra.mxu0 %v890
    %1457 = vmatprep.subr.mxu0 %v897
    %1458 = vmatpush1.msra.mxu0 %v896
    %1459 = vmatprep.subr.mxu0 %v903
    %1460 = vmatpush1.msra.mxu0 %v902
    %1461 = vmatprep.subr.mxu0 %v909
    %1462 = vmatpush1.msra.mxu0 %v908
    %1463 = vmatprep.subr.mxu0 %v915
    %1464 = vmatpush1.msra.mxu0 %v914
    %1465 = vmatprep.subr.mxu0 %v921
    %1466 = vmatpush1.msra.mxu0 %v920
    %1467 = vmatprep.subr.mxu0 %v927
    %1468 = vmatpush1.msra.mxu0 %v926
    %1469 = vmatprep.subr.mxu0 %v933
    %1470 = vmatpush1.msra.mxu0 %v932
    %1471 = vmatprep.subr.mxu0 %v939
    %1472 = vmatpush1.msra.mxu0 %v938
    %1473 = vmatprep.subr.mxu0 %v945
    %1474 = vmatpush1.msra.mxu0 %v944
    %1475 = vmatprep.subr.mxu0 %v951
    %1476 = vmatpush1.msra.mxu0 %v950
    %1477 = vmatprep.subr.mxu0 %v957
    %1478 = vmatpush1.msra.mxu0 %v956
    %1479 = vmatprep.subr.mxu0 %v963
    %1480 = vmatpush1.msra.mxu0 %v962
    %1481 = vmatprep.subr.mxu0 %v969
    %1482 = vmatpush1.msra.mxu0 %v968
    %1483 = vmatprep.subr.mxu0 %v975
    %1484 = vmatpush1.msra.mxu0 %v974
    %1485 = vmatprep.subr.mxu0 %v981
    %1486 = vmatpush1.msra.mxu0 %v980
    %1487 = vmatprep.subr.mxu0 %v987
    %1488 = vmatpush1.msra.mxu0 %v986
    %1489 = vmatprep.subr.mxu0 %v993
    %1490 = vmatpush1.msra.mxu0 %v992
    %1491 = vmatprep.subr.mxu0 %v999
    %1492 = vmatpush1.msra.mxu0 %v998
    %1493 = vmatprep.subr.mxu0 %v1005
    %1494 = vmatpush1.msra.mxu0 %v1004
    %1495 = vmatprep.subr.mxu0 %v1011
    %1496 = vmatpush1.msra.mxu0 %v1010
    %1497 = vmatprep.subr.mxu0 %v1017
    %1498 = vmatpush1.msra.mxu0 %v1016
    %1499 = vmatprep.subr.mxu0 %v1023
    %1500 = vmatpush1.msra.mxu0 %v1022
    %1501 = vmatprep.subr.mxu0 %v1029
    %1502 = vmatpush1.msra.mxu0 %v1028
    %1503 = vmatprep.subr.mxu0 %v1035
    %1504 = vmatpush1.msra.mxu0 %v1034
    %1505 = vmatprep.subr.mxu0 %v1041
    %1506 = vmatpush1.msra.mxu0 %v1040
    %1507 = vmatprep.subr.mxu0 %v1047
    %1508 = vmatpush1.msra.mxu0 %v1046
    %1509 = vmatprep.subr.mxu0 %v1053
    %1510 = vmatpush1.msra.mxu0 %v1052
    %1511 = vmatprep.subr.mxu0 %v1059
    %1512 = vmatpush1.msra.mxu0 %v1058
    %1513 = vmatprep.mubr.f32.mxu0 %v485
    %1514 = vmatmul.mubr.f32.gmra.mrb[0].mxu0 %v484
    %v1515 = vpop.f32.mrb[0].mxu0
    %v1516 = vadd.f32 %v1445, %v1515
    %v1517 = vpop.f32.mrb[0].mxu0
    %v1518 = vadd.f32 %v1447, %v1517
    %1519 = vdwg.mxu0
    %1520 = vmatprep.subr.mxu0 %v491
    %1521 = vmatpush1.msra.mxu0 %v490
    %1522 = vmatprep.subr.mxu0 %v497
    %1523 = vmatpush1.msra.mxu0 %v496
    %1524 = vmatprep.subr.mxu0 %v503
    %1525 = vmatpush1.msra.mxu0 %v502
    %1526 = vmatprep.subr.mxu0 %v509
    %1527 = vmatpush1.msra.mxu0 %v508
    %1528 = vmatprep.subr.mxu0 %v515
    %1529 = vmatpush1.msra.mxu0 %v514
    %1530 = vmatprep.subr.mxu0 %v521
    %1531 = vmatpush1.msra.mxu0 %v520
    %1532 = vmatprep.subr.mxu0 %v527
    %1533 = vmatpush1.msra.mxu0 %v526
    %1534 = vmatprep.subr.mxu0 %v533
    %1535 = vmatpush1.msra.mxu0 %v532
    %1536 = vmatprep.subr.mxu0 %v539
    %1537 = vmatpush1.msra.mxu0 %v538
    %1538 = vmatprep.subr.mxu0 %v545
    %1539 = vmatpush1.msra.mxu0 %v544
    %1540 = vmatprep.subr.mxu0 %v551
    %1541 = vmatpush1.msra.mxu0 %v550
    %1542 = vmatprep.subr.mxu0 %v557
    %1543 = vmatpush1.msra.mxu0 %v556
    %1544 = vmatprep.subr.mxu0 %v563
    %1545 = vmatpush1.msra.mxu0 %v562
    %1546 = vmatprep.subr.mxu0 %v569
    %1547 = vmatpush1.msra.mxu0 %v568
    %1548 = vmatprep.subr.mxu0 %v575
    %1549 = vmatpush1.msra.mxu0 %v574
    %1550 = vmatprep.subr.mxu0 %v581
    %1551 = vmatpush1.msra.mxu0 %v580
    %1552 = vmatprep.subr.mxu0 %v587
    %1553 = vmatpush1.msra.mxu0 %v586
    %1554 = vmatprep.subr.mxu0 %v593
    %1555 = vmatpush1.msra.mxu0 %v592
    %1556 = vmatprep.subr.mxu0 %v599
    %1557 = vmatpush1.msra.mxu0 %v598
    %1558 = vmatprep.subr.mxu0 %v605
    %1559 = vmatpush1.msra.mxu0 %v604
    %1560 = vmatprep.subr.mxu0 %v611
    %1561 = vmatpush1.msra.mxu0 %v610
    %1562 = vmatprep.subr.mxu0 %v617
    %1563 = vmatpush1.msra.mxu0 %v616
    %1564 = vmatprep.subr.mxu0 %v623
    %1565 = vmatpush1.msra.mxu0 %v622
    %1566 = vmatprep.subr.mxu0 %v629
    %1567 = vmatpush1.msra.mxu0 %v628
    %1568 = vmatprep.subr.mxu0 %v635
    %1569 = vmatpush1.msra.mxu0 %v634
    %1570 = vmatprep.subr.mxu0 %v641
    %1571 = vmatpush1.msra.mxu0 %v640
    %1572 = vmatprep.subr.mxu0 %v647
    %1573 = vmatpush1.msra.mxu0 %v646
    %1574 = vmatprep.subr.mxu0 %v653
    %1575 = vmatpush1.msra.mxu0 %v652
    %1576 = vmatprep.subr.mxu0 %v659
    %1577 = vmatpush1.msra.mxu0 %v658
    %1578 = vmatprep.subr.mxu0 %v665
    %1579 = vmatpush1.msra.mxu0 %v664
    %1580 = vmatprep.subr.mxu0 %v671
    %1581 = vmatpush1.msra.mxu0 %v670
    %1582 = vmatprep.subr.mxu0 %v677
    %1583 = vmatpush1.msra.mxu0 %v676
    %1584 = vmatprep.mubr.f32.mxu0 %v481
    %1585 = vmatmul.mubr.f32.gmra.mrb[0].mxu0 %v480
    %v1586 = vpop.f32.mrb[0].mxu0
    %v1587 = vadd.f32 %v1083, %v1586
    %v1588 = vpop.f32.mrb[0].mxu0
    %v1589 = vadd.f32 %v1087, %v1588
    %1590 = vdwg.mxu0
    %1591 = vmatprep.subr.mxu0 %v683
    %1592 = vmatpush1.msra.mxu0 %v682
    %1593 = vmatprep.subr.mxu0 %v689
    %1594 = vmatpush1.msra.mxu0 %v688
    %1595 = vmatprep.subr.mxu0 %v695
    %1596 = vmatpush1.msra.mxu0 %v694
    %1597 = vmatprep.subr.mxu0 %v701
    %1598 = vmatpush1.msra.mxu0 %v700
    %1599 = vmatprep.subr.mxu0 %v707
    %1600 = vmatpush1.msra.mxu0 %v706
    %1601 = vmatprep.subr.mxu0 %v713
    %1602 = vmatpush1.msra.mxu0 %v712
    %1603 = vmatprep.subr.mxu0 %v719
    %1604 = vmatpush1.msra.mxu0 %v718
    %1605 = vmatprep.subr.mxu0 %v725
    %1606 = vmatpush1.msra.mxu0 %v724
    %1607 = vmatprep.subr.mxu0 %v731
    %1608 = vmatpush1.msra.mxu0 %v730
    %1609 = vmatprep.subr.mxu0 %v737
    %1610 = vmatpush1.msra.mxu0 %v736
    %1611 = vmatprep.subr.mxu0 %v743
    %1612 = vmatpush1.msra.mxu0 %v742
    %1613 = vmatprep.subr.mxu0 %v749
    %1614 = vmatpush1.msra.mxu0 %v748
    %1615 = vmatprep.subr.mxu0 %v755
    %1616 = vmatpush1.msra.mxu0 %v754
    %1617 = vmatprep.subr.mxu0 %v761
    %1618 = vmatpush1.msra.mxu0 %v760
    %1619 = vmatprep.subr.mxu0 %v767
    %1620 = vmatpush1.msra.mxu0 %v766
    %1621 = vmatprep.subr.mxu0 %v773
    %1622 = vmatpush1.msra.mxu0 %v772
    %1623 = vmatprep.subr.mxu0 %v779
    %1624 = vmatpush1.msra.mxu0 %v778
    %1625 = vmatprep.subr.mxu0 %v785
    %1626 = vmatpush1.msra.mxu0 %v784
    %1627 = vmatprep.subr.mxu0 %v791
    %1628 = vmatpush1.msra.mxu0 %v790
    %1629 = vmatprep.subr.mxu0 %v797
    %1630 = vmatpush1.msra.mxu0 %v796
    %1631 = vmatprep.subr.mxu0 %v803
    %1632 = vmatpush1.msra.mxu0 %v802
    %1633 = vmatprep.subr.mxu0 %v809
    %1634 = vmatpush1.msra.mxu0 %v808
    %1635 = vmatprep.subr.mxu0 %v815
    %1636 = vmatpush1.msra.mxu0 %v814
    %1637 = vmatprep.subr.mxu0 %v821
    %1638 = vmatpush1.msra.mxu0 %v820
    %1639 = vmatprep.subr.mxu0 %v827
    %1640 = vmatpush1.msra.mxu0 %v826
    %1641 = vmatprep.subr.mxu0 %v833
    %1642 = vmatpush1.msra.mxu0 %v832
    %1643 = vmatprep.subr.mxu0 %v839
    %1644 = vmatpush1.msra.mxu0 %v838
    %1645 = vmatprep.subr.mxu0 %v845
    %1646 = vmatpush1.msra.mxu0 %v844
    %1647 = vmatprep.subr.mxu0 %v851
    %1648 = vmatpush1.msra.mxu0 %v850
    %1649 = vmatprep.subr.mxu0 %v857
    %1650 = vmatpush1.msra.mxu0 %v856
    %1651 = vmatprep.subr.mxu0 %v863
    %1652 = vmatpush1.msra.mxu0 %v862
    %1653 = vmatprep.subr.mxu0 %v869
    %1654 = vmatpush1.msra.mxu0 %v868
    %1655 = vmatprep.mubr.f32.mxu0 %v483
    %1656 = vmatmul.mubr.f32.gmra.mrb[0].mxu0 %v482
    %v1657 = vpop.f32.mrb[0].mxu0
    %v1658 = vadd.f32 %v1587, %v1657
    %v1659 = vpop.f32.mrb[0].mxu0
    %v1660 = vadd.f32 %v1589, %v1659
    %1661 = vdwg.mxu0
    %1662 = vmatprep.subr.mxu0 %v875
    %1663 = vmatpush1.msra.mxu0 %v874
    %1664 = vmatprep.subr.mxu0 %v881
    %1665 = vmatpush1.msra.mxu0 %v880
    %1666 = vmatprep.subr.mxu0 %v887
    %1667 = vmatpush1.msra.mxu0 %v886
    %1668 = vmatprep.subr.mxu0 %v893
    %1669 = vmatpush1.msra.mxu0 %v892
    %1670 = vmatprep.subr.mxu0 %v899
    %1671 = vmatpush1.msra.mxu0 %v898
    %1672 = vmatprep.subr.mxu0 %v905
    %1673 = vmatpush1.msra.mxu0 %v904
    %1674 = vmatprep.subr.mxu0 %v911
    %1675 = vmatpush1.msra.mxu0 %v910
    %1676 = vmatprep.subr.mxu0 %v917
    %1677 = vmatpush1.msra.mxu0 %v916
    %1678 = vmatprep.subr.mxu0 %v923
    %1679 = vmatpush1.msra.mxu0 %v922
    %1680 = vmatprep.subr.mxu0 %v929
    %1681 = vmatpush1.msra.mxu0 %v928
    %1682 = vmatprep.subr.mxu0 %v935
    %1683 = vmatpush1.msra.mxu0 %v934
    %1684 = vmatprep.subr.mxu0 %v941
    %1685 = vmatpush1.msra.mxu0 %v940
    %1686 = vmatprep.subr.mxu0 %v947
    %1687 = vmatpush1.msra.mxu0 %v946
    %1688 = vmatprep.subr.mxu0 %v953
    %1689 = vmatpush1.msra.mxu0 %v952
    %1690 = vmatprep.subr.mxu0 %v959
    %1691 = vmatpush1.msra.mxu0 %v958
    %1692 = vmatprep.subr.mxu0 %v965
    %1693 = vmatpush1.msra.mxu0 %v964
    %1694 = vmatprep.subr.mxu0 %v971
    %1695 = vmatpush1.msra.mxu0 %v970
    %1696 = vmatprep.subr.mxu0 %v977
    %1697 = vmatpush1.msra.mxu0 %v976
    %1698 = vmatprep.subr.mxu0 %v983
    %1699 = vmatpush1.msra.mxu0 %v982
    %1700 = vmatprep.subr.mxu0 %v989
    %1701 = vmatpush1.msra.mxu0 %v988
    %1702 = vmatprep.subr.mxu0 %v995
    %1703 = vmatpush1.msra.mxu0 %v994
    %1704 = vmatprep.subr.mxu0 %v1001
    %1705 = vmatpush1.msra.mxu0 %v1000
    %1706 = vmatprep.subr.mxu0 %v1007
    %1707 = vmatpush1.msra.mxu0 %v1006
    %1708 = vmatprep.subr.mxu0 %v1013
    %1709 = vmatpush1.msra.mxu0 %v1012
    %1710 = vmatprep.subr.mxu0 %v1019
    %1711 = vmatpush1.msra.mxu0 %v1018
    %1712 = vmatprep.subr.mxu0 %v1025
    %1713 = vmatpush1.msra.mxu0 %v1024
    %1714 = vmatprep.subr.mxu0 %v1031
    %1715 = vmatpush1.msra.mxu0 %v1030
    %1716 = vmatprep.subr.mxu0 %v1037
    %1717 = vmatpush1.msra.mxu0 %v1036
    %1718 = vmatprep.subr.mxu0 %v1043
    %1719 = vmatpush1.msra.mxu0 %v1042
    %1720 = vmatprep.subr.mxu0 %v1049
    %1721 = vmatpush1.msra.mxu0 %v1048
    %1722 = vmatprep.subr.mxu0 %v1055
    %1723 = vmatpush1.msra.mxu0 %v1054
    %1724 = vmatprep.subr.mxu0 %v1061
    %1725 = vmatpush1.msra.mxu0 %v1060
    %1726 = vmatprep.mubr.f32.mxu0 %v485
    %1727 = vmatmul.mubr.f32.gmra.mrb[0].mxu0 %v484
    %v1728 = vpop.f32.mrb[0].mxu0
    %v1729 = vadd.f32 %v1658, %v1728
    %v1730 = vpop.f32.mrb[0].mxu0
    %v1731 = vadd.f32 %v1660, %v1730
    %1732 = vdwg.mxu0
    %v1733 = vmax.f32 %v1303, 0.0
    %v1734 = vmax.f32 %v1305, 0.0
    %v1735 = vmax.f32 %v1516, 0.0
    %v1736 = vmax.f32 %v1518, 0.0
    %v1737 = vmax.f32 %v1729, 0.0
    %v1738 = vmax.f32 %v1731, 0.0
    %v1739 = vld [vmem:[#allocation11] sm:$0xff]
    %v1740 = vld [vmem:[#allocation11 + $0x8] sm:$0xff]
    %v1741 = vld [vmem:[#allocation11 + $0x10] sm:$0xff]
    %v1742 = vld [vmem:[#allocation11 + $0x18] sm:$0xff]
    %v1743 = vld [vmem:[#allocation11 + $0x20] sm:$0xff]
    %v1744 = vld [vmem:[#allocation11 + $0x28] sm:$0xff]
    %v1745 = vld [vmem:[#allocation11 + $0x30] sm:$0xff]
    %v1746 = vld [vmem:[#allocation11 + $0x38] sm:$0xff]
    %v1747 = vld [vmem:[#allocation11 + $0x40] sm:$0xff]
    %v1748 = vld [vmem:[#allocation11 + $0x48] sm:$0xff]
    %v1749 = vld [vmem:[#allocation11 + $0x50] sm:$0xff]
    %v1750 = vld [vmem:[#allocation11 + $0x58] sm:$0xff]
    %v1751 = vld [vmem:[#allocation11 + $0x60] sm:$0xff]
    %v1752 = vld [vmem:[#allocation11 + $0x68] sm:$0xff]
    %v1753 = vld [vmem:[#allocation11 + $0x70] sm:$0xff]
    %v1754 = vld [vmem:[#allocation11 + $0x78] sm:$0xff]
    %v1755 = vld [vmem:[#allocation11 + $0x80] sm:$0xff]
    %v1756 = vld [vmem:[#allocation11 + $0x88] sm:$0xff]
    %v1757 = vld [vmem:[#allocation11 + $0x90] sm:$0xff]
    %v1758 = vld [vmem:[#allocation11 + $0x98] sm:$0xff]
    %v1759 = vld [vmem:[#allocation11 + $0xa0] sm:$0xff]
    %v1760 = vld [vmem:[#allocation11 + $0xa8] sm:$0xff]
    %v1761 = vld [vmem:[#allocation11 + $0xb0] sm:$0xff]
    %v1762 = vld [vmem:[#allocation11 + $0xb8] sm:$0xff]
    %v1763 = vld [vmem:[#allocation11 + $0xc0] sm:$0xff]
    %v1764 = vld [vmem:[#allocation11 + $0xc8] sm:$0xff]
    %v1765 = vld [vmem:[#allocation11 + $0xd0] sm:$0xff]
    %v1766 = vld [vmem:[#allocation11 + $0xd8] sm:$0xff]
    %v1767 = vld [vmem:[#allocation11 + $0xe0] sm:$0xff]
    %v1768 = vld [vmem:[#allocation11 + $0xe8] sm:$0xff]
    %v1769 = vld [vmem:[#allocation11 + $0xf0] sm:$0xff]
    %v1770 = vld [vmem:[#allocation11 + $0xf8] sm:$0xff]
    %v1771 = vld [vmem:[#allocation11 + $0x100] sm:$0xff]
    %v1772 = vld [vmem:[#allocation11 + $0x108] sm:$0xff]
    %v1773 = vld [vmem:[#allocation11 + $0x110] sm:$0xff]
    %v1774 = vld [vmem:[#allocation11 + $0x118] sm:$0xff]
    %v1775 = vld [vmem:[#allocation11 + $0x120] sm:$0xff]
    %v1776 = vld [vmem:[#allocation11 + $0x128] sm:$0xff]
    %v1777 = vld [vmem:[#allocation11 + $0x130] sm:$0xff]
    %v1778 = vld [vmem:[#allocation11 + $0x138] sm:$0xff]
    %v1779 = vld [vmem:[#allocation11 + $0x140] sm:$0xff]
    %v1780 = vld [vmem:[#allocation11 + $0x148] sm:$0xff]
    %v1781 = vld [vmem:[#allocation11 + $0x150] sm:$0xff]
    %v1782 = vld [vmem:[#allocation11 + $0x158] sm:$0xff]
    %v1783 = vld [vmem:[#allocation11 + $0x160] sm:$0xff]
    %v1784 = vld [vmem:[#allocation11 + $0x168] sm:$0xff]
    %v1785 = vld [vmem:[#allocation11 + $0x170] sm:$0xff]
    %v1786 = vld [vmem:[#allocation11 + $0x178] sm:$0xff]
    %v1787 = vld [vmem:[#allocation11 + $0x180] sm:$0xff]
    %v1788 = vld [vmem:[#allocation11 + $0x188] sm:$0xff]
    %v1789 = vld [vmem:[#allocation11 + $0x190] sm:$0xff]
    %v1790 = vld [vmem:[#allocation11 + $0x198] sm:$0xff]
    %v1791 = vld [vmem:[#allocation11 + $0x1a0] sm:$0xff]
    %v1792 = vld [vmem:[#allocation11 + $0x1a8] sm:$0xff]
    %v1793 = vld [vmem:[#allocation11 + $0x1b0] sm:$0xff]
    %v1794 = vld [vmem:[#allocation11 + $0x1b8] sm:$0xff]
    %v1795 = vld [vmem:[#allocation11 + $0x1c0] sm:$0xff]
    %v1796 = vld [vmem:[#allocation11 + $0x1c8] sm:$0xff]
    %v1797 = vld [vmem:[#allocation11 + $0x1d0] sm:$0xff]
    %v1798 = vld [vmem:[#allocation11 + $0x1d8] sm:$0xff]
    %v1799 = vld [vmem:[#allocation11 + $0x1e0] sm:$0xff]
    %v1800 = vld [vmem:[#allocation11 + $0x1e8] sm:$0xff]
    %v1801 = vld [vmem:[#allocation11 + $0x1f0] sm:$0xff]
    %v1802 = vld [vmem:[#allocation11 + $0x1f8] sm:$0xff]
    %v1803 = vld [vmem:[#allocation11 + $0x200] sm:$0xff]
    %v1804 = vld [vmem:[#allocation11 + $0x208] sm:$0xff]
    %v1805 = vld [vmem:[#allocation11 + $0x210] sm:$0xff]
    %v1806 = vld [vmem:[#allocation11 + $0x218] sm:$0xff]
    %v1807 = vld [vmem:[#allocation11 + $0x220] sm:$0xff]
    %v1808 = vld [vmem:[#allocation11 + $0x228] sm:$0xff]
    %v1809 = vld [vmem:[#allocation11 + $0x230] sm:$0xff]
    %v1810 = vld [vmem:[#allocation11 + $0x238] sm:$0xff]
    %v1811 = vld [vmem:[#allocation11 + $0x240] sm:$0xff]
    %v1812 = vld [vmem:[#allocation11 + $0x248] sm:$0xff]
    %v1813 = vld [vmem:[#allocation11 + $0x250] sm:$0xff]
    %v1814 = vld [vmem:[#allocation11 + $0x258] sm:$0xff]
    %v1815 = vld [vmem:[#allocation11 + $0x260] sm:$0xff]
    %v1816 = vld [vmem:[#allocation11 + $0x268] sm:$0xff]
    %v1817 = vld [vmem:[#allocation11 + $0x270] sm:$0xff]
    %v1818 = vld [vmem:[#allocation11 + $0x278] sm:$0xff]
    %v1819 = vld [vmem:[#allocation11 + $0x280] sm:$0xff]
    %v1820 = vld [vmem:[#allocation11 + $0x288] sm:$0xff]
    %v1821 = vld [vmem:[#allocation11 + $0x290] sm:$0xff]
    %v1822 = vld [vmem:[#allocation11 + $0x298] sm:$0xff]
    %v1823 = vld [vmem:[#allocation11 + $0x2a0] sm:$0xff]
    %v1824 = vld [vmem:[#allocation11 + $0x2a8] sm:$0xff]
    %v1825 = vld [vmem:[#allocation11 + $0x2b0] sm:$0xff]
    %v1826 = vld [vmem:[#allocation11 + $0x2b8] sm:$0xff]
    %v1827 = vld [vmem:[#allocation11 + $0x2c0] sm:$0xff]
    %v1828 = vld [vmem:[#allocation11 + $0x2c8] sm:$0xff]
    %v1829 = vld [vmem:[#allocation11 + $0x2d0] sm:$0xff]
    %v1830 = vld [vmem:[#allocation11 + $0x2d8] sm:$0xff]
    %v1831 = vld [vmem:[#allocation11 + $0x2e0] sm:$0xff]
    %v1832 = vld [vmem:[#allocation11 + $0x2e8] sm:$0xff]
    %v1833 = vld [vmem:[#allocation11 + $0x2f0] sm:$0xff]
    %v1834 = vld [vmem:[#allocation11 + $0x2f8] sm:$0xff]
    %v1835 = vld [vmem:[#allocation13] sm:$0x1]
    %v1837 = vlaneseq
    %v1838 = vshrl.u32 %v1837, 7
    %v1839 = vsub.s32 0, %v1838
    %v1840 = vrot.slane %v1835, %v1839
    %1842 = vmatprep.subr.mxu0 0.0
    %1843 = vmatpush1.msra.mxu0 %v1739
    %1844 = vmatprep.subr.mxu0 0.0
    %1845 = vmatpush1.msra.mxu0 %v1740
    %1846 = vmatprep.subr.mxu0 0.0
    %1847 = vmatpush1.msra.mxu0 %v1741
    %1848 = vmatprep.subr.mxu0 0.0
    %1849 = vmatpush1.msra.mxu0 %v1742
    %1850 = vmatprep.subr.mxu0 0.0
    %1851 = vmatpush1.msra.mxu0 %v1743
    %1852 = vmatprep.subr.mxu0 0.0
    %1853 = vmatpush1.msra.mxu0 %v1744
    %1854 = vmatprep.subr.mxu0 0.0
    %1855 = vmatpush1.msra.mxu0 %v1745
    %1856 = vmatprep.subr.mxu0 0.0
    %1857 = vmatpush1.msra.mxu0 %v1746
    %1858 = vmatprep.subr.mxu0 0.0
    %1859 = vmatpush1.msra.mxu0 %v1747
    %1860 = vmatprep.subr.mxu0 0.0
    %1861 = vmatpush1.msra.mxu0 %v1748
    %1862 = vmatprep.subr.mxu0 0.0
    %1863 = vmatpush1.msra.mxu0 %v1749
    %1864 = vmatprep.subr.mxu0 0.0
    %1865 = vmatpush1.msra.mxu0 %v1750
    %1866 = vmatprep.subr.mxu0 0.0
    %1867 = vmatpush1.msra.mxu0 %v1751
    %1868 = vmatprep.subr.mxu0 0.0
    %1869 = vmatpush1.msra.mxu0 %v1752
    %1870 = vmatprep.subr.mxu0 0.0
    %1871 = vmatpush1.msra.mxu0 %v1753
    %1872 = vmatprep.subr.mxu0 0.0
    %1873 = vmatpush1.msra.mxu0 %v1754
    %1874 = vmatprep.subr.mxu0 0.0
    %1875 = vmatpush1.msra.mxu0 %v1755
    %1876 = vmatprep.subr.mxu0 0.0
    %1877 = vmatpush1.msra.mxu0 %v1756
    %1878 = vmatprep.subr.mxu0 0.0
    %1879 = vmatpush1.msra.mxu0 %v1757
    %1880 = vmatprep.subr.mxu0 0.0
    %1881 = vmatpush1.msra.mxu0 %v1758
    %1882 = vmatprep.subr.mxu0 0.0
    %1883 = vmatpush1.msra.mxu0 %v1759
    %1884 = vmatprep.subr.mxu0 0.0
    %1885 = vmatpush1.msra.mxu0 %v1760
    %1886 = vmatprep.subr.mxu0 0.0
    %1887 = vmatpush1.msra.mxu0 %v1761
    %1888 = vmatprep.subr.mxu0 0.0
    %1889 = vmatpush1.msra.mxu0 %v1762
    %1890 = vmatprep.subr.mxu0 0.0
    %1891 = vmatpush1.msra.mxu0 %v1763
    %1892 = vmatprep.subr.mxu0 0.0
    %1893 = vmatpush1.msra.mxu0 %v1764
    %1894 = vmatprep.subr.mxu0 0.0
    %1895 = vmatpush1.msra.mxu0 %v1765
    %1896 = vmatprep.subr.mxu0 0.0
    %1897 = vmatpush1.msra.mxu0 %v1766
    %1898 = vmatprep.subr.mxu0 0.0
    %1899 = vmatpush1.msra.mxu0 %v1767
    %1900 = vmatprep.subr.mxu0 0.0
    %1901 = vmatpush1.msra.mxu0 %v1768
    %1902 = vmatprep.subr.mxu0 0.0
    %1903 = vmatpush1.msra.mxu0 %v1769
    %1904 = vmatprep.subr.mxu0 0.0
    %1905 = vmatpush1.msra.mxu0 %v1770
    %1906 = vmatprep.mubr.f32.mxu0 %v1734
    %1907 = vmatmul.mubr.f32.gmra.mrb[0].mxu0 %v1733
    %v1908 = vpop.f32.mrb[0].mxu0
    %v1909 = vadd.f32 %v1840, %v1908
    %v1910 = vpop.f32.mrb[0].mxu0
    %1911 = vdwg.mxu0
    %1912 = vmatprep.subr.mxu0 0.0
    %1913 = vmatpush1.msra.mxu0 %v1771
    %1914 = vmatprep.subr.mxu0 0.0
    %1915 = vmatpush1.msra.mxu0 %v1772
    %1916 = vmatprep.subr.mxu0 0.0
    %1917 = vmatpush1.msra.mxu0 %v1773
    %1918 = vmatprep.subr.mxu0 0.0
    %1919 = vmatpush1.msra.mxu0 %v1774
    %1920 = vmatprep.subr.mxu0 0.0
    %1921 = vmatpush1.msra.mxu0 %v1775
    %1922 = vmatprep.subr.mxu0 0.0
    %1923 = vmatpush1.msra.mxu0 %v1776
    %1924 = vmatprep.subr.mxu0 0.0
    %1925 = vmatpush1.msra.mxu0 %v1777
    %1926 = vmatprep.subr.mxu0 0.0
    %1927 = vmatpush1.msra.mxu0 %v1778
    %1928 = vmatprep.subr.mxu0 0.0
    %1929 = vmatpush1.msra.mxu0 %v1779
    %1930 = vmatprep.subr.mxu0 0.0
    %1931 = vmatpush1.msra.mxu0 %v1780
    %1932 = vmatprep.subr.mxu0 0.0
    %1933 = vmatpush1.msra.mxu0 %v1781
    %1934 = vmatprep.subr.mxu0 0.0
    %1935 = vmatpush1.msra.mxu0 %v1782
    %1936 = vmatprep.subr.mxu0 0.0
    %1937 = vmatpush1.msra.mxu0 %v1783
    %1938 = vmatprep.subr.mxu0 0.0
    %1939 = vmatpush1.msra.mxu0 %v1784
    %1940 = vmatprep.subr.mxu0 0.0
    %1941 = vmatpush1.msra.mxu0 %v1785
    %1942 = vmatprep.subr.mxu0 0.0
    %1943 = vmatpush1.msra.mxu0 %v1786
    %1944 = vmatprep.subr.mxu0 0.0
    %1945 = vmatpush1.msra.mxu0 %v1787
    %1946 = vmatprep.subr.mxu0 0.0
    %1947 = vmatpush1.msra.mxu0 %v1788
    %1948 = vmatprep.subr.mxu0 0.0
    %1949 = vmatpush1.msra.mxu0 %v1789
    %1950 = vmatprep.subr.mxu0 0.0
    %1951 = vmatpush1.msra.mxu0 %v1790
    %1952 = vmatprep.subr.mxu0 0.0
    %1953 = vmatpush1.msra.mxu0 %v1791
    %1954 = vmatprep.subr.mxu0 0.0
    %1955 = vmatpush1.msra.mxu0 %v1792
    %1956 = vmatprep.subr.mxu0 0.0
    %1957 = vmatpush1.msra.mxu0 %v1793
    %1958 = vmatprep.subr.mxu0 0.0
    %1959 = vmatpush1.msra.mxu0 %v1794
    %1960 = vmatprep.subr.mxu0 0.0
    %1961 = vmatpush1.msra.mxu0 %v1795
    %1962 = vmatprep.subr.mxu0 0.0
    %1963 = vmatpush1.msra.mxu0 %v1796
    %1964 = vmatprep.subr.mxu0 0.0
    %1965 = vmatpush1.msra.mxu0 %v1797
    %1966 = vmatprep.subr.mxu0 0.0
    %1967 = vmatpush1.msra.mxu0 %v1798
    %1968 = vmatprep.subr.mxu0 0.0
    %1969 = vmatpush1.msra.mxu0 %v1799
    %1970 = vmatprep.subr.mxu0 0.0
    %1971 = vmatpush1.msra.mxu0 %v1800
    %1972 = vmatprep.subr.mxu0 0.0
    %1973 = vmatpush1.msra.mxu0 %v1801
    %1974 = vmatprep.subr.mxu0 0.0
    %1975 = vmatpush1.msra.mxu0 %v1802
    %1976 = vmatprep.mubr.f32.mxu0 %v1736
    %1977 = vmatmul.mubr.f32.gmra.mrb[0].mxu0 %v1735
    %v1978 = vpop.f32.mrb[0].mxu0
    %v1979 = vadd.f32 %v1909, %v1978
    %v1980 = vpop.f32.mrb[0].mxu0
    %1981 = vdwg.mxu0
    %1982 = vmatprep.subr.mxu0 0.0
    %1983 = vmatpush1.msra.mxu0 %v1803
    %1984 = vmatprep.subr.mxu0 0.0
    %1985 = vmatpush1.msra.mxu0 %v1804
    %1986 = vmatprep.subr.mxu0 0.0
    %1987 = vmatpush1.msra.mxu0 %v1805
    %1988 = vmatprep.subr.mxu0 0.0
    %1989 = vmatpush1.msra.mxu0 %v1806
    %1990 = vmatprep.subr.mxu0 0.0
    %1991 = vmatpush1.msra.mxu0 %v1807
    %1992 = vmatprep.subr.mxu0 0.0
    %1993 = vmatpush1.msra.mxu0 %v1808
    %1994 = vmatprep.subr.mxu0 0.0
    %1995 = vmatpush1.msra.mxu0 %v1809
    %1996 = vmatprep.subr.mxu0 0.0
    %1997 = vmatpush1.msra.mxu0 %v1810
    %1998 = vmatprep.subr.mxu0 0.0
    %1999 = vmatpush1.msra.mxu0 %v1811
    %2000 = vmatprep.subr.mxu0 0.0
    %2001 = vmatpush1.msra.mxu0 %v1812
    %2002 = vmatprep.subr.mxu0 0.0
    %2003 = vmatpush1.msra.mxu0 %v1813
    %2004 = vmatprep.subr.mxu0 0.0
    %2005 = vmatpush1.msra.mxu0 %v1814
    %2006 = vmatprep.subr.mxu0 0.0
    %2007 = vmatpush1.msra.mxu0 %v1815
    %2008 = vmatprep.subr.mxu0 0.0
    %2009 = vmatpush1.msra.mxu0 %v1816
    %2010 = vmatprep.subr.mxu0 0.0
    %2011 = vmatpush1.msra.mxu0 %v1817
    %2012 = vmatprep.subr.mxu0 0.0
    %2013 = vmatpush1.msra.mxu0 %v1818
    %2014 = vmatprep.subr.mxu0 0.0
    %2015 = vmatpush1.msra.mxu0 %v1819
    %2016 = vmatprep.subr.mxu0 0.0
    %2017 = vmatpush1.msra.mxu0 %v1820
    %2018 = vmatprep.subr.mxu0 0.0
    %2019 = vmatpush1.msra.mxu0 %v1821
    %2020 = vmatprep.subr.mxu0 0.0
    %2021 = vmatpush1.msra.mxu0 %v1822
    %2022 = vmatprep.subr.mxu0 0.0
    %2023 = vmatpush1.msra.mxu0 %v1823
    %2024 = vmatprep.subr.mxu0 0.0
    %2025 = vmatpush1.msra.mxu0 %v1824
    %2026 = vmatprep.subr.mxu0 0.0
    %2027 = vmatpush1.msra.mxu0 %v1825
    %2028 = vmatprep.subr.mxu0 0.0
    %2029 = vmatpush1.msra.mxu0 %v1826
    %2030 = vmatprep.subr.mxu0 0.0
    %2031 = vmatpush1.msra.mxu0 %v1827
    %2032 = vmatprep.subr.mxu0 0.0
    %2033 = vmatpush1.msra.mxu0 %v1828
    %2034 = vmatprep.subr.mxu0 0.0
    %2035 = vmatpush1.msra.mxu0 %v1829
    %2036 = vmatprep.subr.mxu0 0.0
    %2037 = vmatpush1.msra.mxu0 %v1830
    %2038 = vmatprep.subr.mxu0 0.0
    %2039 = vmatpush1.msra.mxu0 %v1831
    %2040 = vmatprep.subr.mxu0 0.0
    %2041 = vmatpush1.msra.mxu0 %v1832
    %2042 = vmatprep.subr.mxu0 0.0
    %2043 = vmatpush1.msra.mxu0 %v1833
    %2044 = vmatprep.subr.mxu0 0.0
    %2045 = vmatpush1.msra.mxu0 %v1834
    %2046 = vmatprep.mubr.f32.mxu0 %v1738
    %2047 = vmatmul.mubr.f32.gmra.mrb[0].mxu0 %v1737
    %v2048 = vpop.f32.mrb[0].mxu0
    %v2049 = vadd.f32 %v1979, %v2048
    %v2050 = vpop.f32.mrb[0].mxu0
    %2051 = vdwg.mxu0
    %v2052 = vmax.f32 %v2049, 0.0
    %v2053 = vld [vmem:[#allocation14] sm:$0xff]
    %v2054 = vld [vmem:[#allocation14 + $0x8] sm:$0xff]
    %v2055 = vld [vmem:[#allocation14 + $0x10] sm:$0xff]
    %v2056 = vld [vmem:[#allocation14 + $0x18] sm:$0xff]
    %v2057 = vld [vmem:[#allocation14 + $0x20] sm:$0xff]
    %v2058 = vld [vmem:[#allocation14 + $0x28] sm:$0xff]
    %v2059 = vld [vmem:[#allocation14 + $0x30] sm:$0xff]
    %v2060 = vld [vmem:[#allocation14 + $0x38] sm:$0xff]
    %v2061 = vld [vmem:[#allocation14 + $0x40] sm:$0xff]
    %v2062 = vld [vmem:[#allocation14 + $0x48] sm:$0xff]
    %v2063 = vld [vmem:[#allocation14 + $0x50] sm:$0xff]
    %v2064 = vld [vmem:[#allocation14 + $0x58] sm:$0xff]
    %v2065 = vld [vmem:[#allocation14 + $0x60] sm:$0xff]
    %v2066 = vld [vmem:[#allocation14 + $0x68] sm:$0xff]
    %v2067 = vld [vmem:[#allocation14 + $0x70] sm:$0xff]
    %v2068 = vld [vmem:[#allocation14 + $0x78] sm:$0xff]
    %v2069 = vld [vmem:[#allocation16] sm:$0x1]
    %v2071 = vlaneseq
    %v2072 = vshrl.u32 %v2071, 7
    %v2073 = vsub.s32 0, %v2072
    %v2074 = vrot.slane %v2069, %v2073
    %2076 = vmatprep.subr.mxu0 0.0
    %2077 = vmatpush1.msra.mxu0 %v2053
    %2078 = vmatprep.subr.mxu0 0.0
    %2079 = vmatpush1.msra.mxu0 %v2054
    %2080 = vmatprep.subr.mxu0 0.0
    %2081 = vmatpush1.msra.mxu0 %v2055
    %2082 = vmatprep.subr.mxu0 0.0
    %2083 = vmatpush1.msra.mxu0 %v2056
    %2084 = vmatprep.subr.mxu0 0.0
    %2085 = vmatpush1.msra.mxu0 %v2057
    %2086 = vmatprep.subr.mxu0 0.0
    %2087 = vmatpush1.msra.mxu0 %v2058
    %2088 = vmatprep.subr.mxu0 0.0
    %2089 = vmatpush1.msra.mxu0 %v2059
    %2090 = vmatprep.subr.mxu0 0.0
    %2091 = vmatpush1.msra.mxu0 %v2060
    %2092 = vmatprep.subr.mxu0 0.0
    %2093 = vmatpush1.msra.mxu0 %v2061
    %2094 = vmatprep.subr.mxu0 0.0
    %2095 = vmatpush1.msra.mxu0 %v2062
    %2096 = vmatprep.subr.mxu0 0.0
    %2097 = vmatpush1.msra.mxu0 %v2063
    %2098 = vmatprep.subr.mxu0 0.0
    %2099 = vmatpush1.msra.mxu0 %v2064
    %2100 = vmatprep.subr.mxu0 0.0
    %2101 = vmatpush1.msra.mxu0 %v2065
    %2102 = vmatprep.subr.mxu0 0.0
    %2103 = vmatpush1.msra.mxu0 %v2066
    %2104 = vmatprep.subr.mxu0 0.0
    %2105 = vmatpush1.msra.mxu0 %v2067
    %2106 = vmatprep.subr.mxu0 0.0
    %2107 = vmatpush1.msra.mxu0 %v2068
    %2108 = vmatprep.subr.mxu0 0.0
    %2109 = vmatpush1.msra.mxu0 0.0
    %2110 = vmatprep.subr.mxu0 0.0
    %2111 = vmatpush1.msra.mxu0 0.0
    %2112 = vmatprep.subr.mxu0 0.0
    %2113 = vmatpush1.msra.mxu0 0.0
    %2114 = vmatprep.subr.mxu0 0.0
    %2115 = vmatpush1.msra.mxu0 0.0
    %2116 = vmatprep.subr.mxu0 0.0
    %2117 = vmatpush1.msra.mxu0 0.0
    %2118 = vmatprep.subr.mxu0 0.0
    %2119 = vmatpush1.msra.mxu0 0.0
    %2120 = vmatprep.subr.mxu0 0.0
    %2121 = vmatpush1.msra.mxu0 0.0
    %2122 = vmatprep.subr.mxu0 0.0
    %2123 = vmatpush1.msra.mxu0 0.0
    %2124 = vmatprep.subr.mxu0 0.0
    %2125 = vmatpush1.msra.mxu0 0.0
    %2126 = vmatprep.subr.mxu0 0.0
    %2127 = vmatpush1.msra.mxu0 0.0
    %2128 = vmatprep.subr.mxu0 0.0
    %2129 = vmatpush1.msra.mxu0 0.0
    %2130 = vmatprep.subr.mxu0 0.0
    %2131 = vmatpush1.msra.mxu0 0.0
    %2132 = vmatprep.subr.mxu0 0.0
    %2133 = vmatpush1.msra.mxu0 0.0
    %2134 = vmatprep.subr.mxu0 0.0
    %2135 = vmatpush1.msra.mxu0 0.0
    %2136 = vmatprep.subr.mxu0 0.0
    %2137 = vmatpush1.msra.mxu0 0.0
    %2138 = vmatprep.subr.mxu0 0.0
    %2139 = vmatpush1.msra.mxu0 0.0
    %2140 = vmatprep.mubr.f32.mxu0 0.0
    %2141 = vmatmul.mubr.f32.gmra.mrb[0].mxu0 %v2052
    %v2142 = vpop.f32.mrb[0].mxu0
    %v2143 = vadd.f32 %v2074, %v2142
    %v2144 = vpop.f32.mrb[0].mxu0
    %2145 = vdwg.mxu0
    %2146 = vst [vmem:[#allocation17] sm:$0xff] %v2143
    // Predicated region
    $region74: #{tpu_custom_call.1} parent=1 // pred_check
      _
    $region75: #{tpu_custom_call.1} parent=1 // pred_check_branch
      %2148 = sbr.rel (0) target = $region77
    $region76: #{tpu_custom_call.1} parent=1 // pred_region
      %s2150 = ssub.s32 128, 128
      %2151 = vsyncadd [#allocation4], %s2150
      %s2153 = sshll.u32 [#allocation17], 4
      %s2154 = int_to_ptr.vmem [resolvable:$true] %s2153
      %2156 = dma.vmem_to_hbm [thread:$0]  %s2154, 128, %s9, [#allocation4]
    $region77: #{tpu_custom_call.1} parent=1 // pred_fallthru
      _
    // Predicated region
    $region78: #{tpu_custom_call.1} parent=1 // pred_check
      _
    $region79: #{tpu_custom_call.1} parent=1 // pred_check_branch
      %2158 = sbr.rel (0) target = $region81
    $region80: #{tpu_custom_call.1} parent=1 // pred_region
      %2159 = dma.done [#allocation4], 128
    $region81: #{tpu_custom_call.1} parent=1 // pred_fallthru
      _
    %2160 = vsyncpa [#allocation3], 1
    %2161 = vsyncpa [#allocation6], 1
    %2162 = vsyncpa [#allocation9], 1
    %2163 = vsyncpa [#allocation12], 1
    %2164 = vsyncpa [#allocation15], 1
    %2165 = vsyncpa [#allocation4], 1

</llo_original>
